<compile_context>
chip_gen: v5e
topology: v5e:2x2
jax: 0.10.0
libtpu: 0.0.40
codegen_flags: <defaults>
</compile_context>

<pallas_src>
import functools

import numpy as np

import jax
import jax.numpy as jnp
from jax import lax
from jax.experimental import pallas as pl
from jax.experimental.pallas import tpu as pltpu


def _round_up(x, m):
    return (x + m - 1) // m * m


@functools.lru_cache(maxsize=None)
def _roll_sign(rows, wp, cin):
    """Probe pltpu.roll on the exact (rows, Wp, Cin) f32 shape used in-kernel.

    Returns +1 if it follows jnp.roll's convention (positive shift moves
    elements to higher indices), -1 if reversed, 0 if unavailable (the kernel
    then falls back to unaligned value slices, which are correct but slower).
    """
    shape = (rows, wp, cin)
    shift = wp - 1
    x = np.arange(np.prod(shape), dtype=np.float32).reshape(shape)

    def k(x_ref, o_ref):
        o_ref[...] = pltpu.roll(x_ref[...], shift, 1)

    try:
        y = np.asarray(
            pl.pallas_call(k, out_shape=jax.ShapeDtypeStruct(shape, jnp.float32))(
                jnp.asarray(x)))
    except Exception:
        return 0
    if np.array_equal(y, np.roll(x, shift, axis=1)):
        return 1
    if np.array_equal(y, np.roll(x, -shift, axis=1)):
        return -1
    return 0


def _conv_dw_kernel(BH, W, W8, Wp, Cin, roll_sign,
                    x_ref, wdw_ref, b1_ref, wpw_ref, b2_ref,
                    o_ref, h_ref):
    # x_ref  : (1, H+2, Wp, Cin) bf16  zero-padded NHWC, one batch element
    # wdw_ref: (9, Cin)          f32   depthwise taps, BN1 scale folded in
    # b1_ref : (1, Cin)          f32   folded BN1 bias
    # wpw_ref: (Cin, TC)         bf16  pointwise weights (one Cout tile), BN2 scale folded in
    # b2_ref : (1, TC)           f32   folded BN2 bias (one Cout tile)
    # o_ref  : (1, BH, W, TC)    bf16  output block (one H band, one Cout tile)
    # h_ref  : (BH*W8, Cin)      bf16  VMEM scratch: cached depthwise+BN1+ReLU
    hb = pl.program_id(1)
    j = pl.program_id(2)

    @pl.when(j == 0)
    def _compute_depthwise():
        row0 = hb * BH
        if BH % 8 == 0:
            row0 = pl.multiple_of(row0, 8)
        # Load only this band's rows (+2 halo); upcast bf16 -> f32 for the
        # VPU MAC (v5e has no bf16 VPU; TODO(synk): bf16 MAC on v6e/v7x).
        xb = x_ref[0, pl.ds(row0, BH + 2)].astype(jnp.float32)   # (BH+2, Wp, Cin)
        wdw = wdw_ref[...]                                       # (9, Cin)
        acc = None
        for kx in range(3):
            # W-axis (sublane) shift: take it once per kx and reuse across the
            # three ky offsets (ky lives on the untiled leading axis = free).
            if kx == 0:
                xs = xb[:, :W8, :]
            elif roll_sign != 0:
                shift = (Wp - kx) if roll_sign > 0 else kx
                xs = pltpu.roll(xb, shift, 1)[:, :W8, :]          # XLU, ~free
            else:
                xs = xb[:, kx:kx + W8, :]                         # fallback (relayout)
            for ky in range(3):
                tap = wdw[ky * 3 + kx].reshape(1, 1, Cin)
                term = xs[ky:ky + BH] * tap                       # (BH, W8, Cin)
                acc = term if acc is None else acc + term
        hm = jnp.maximum(acc + b1_ref[...].reshape(1, 1, Cin), 0.0)
        # W8 % 8 == 0 so this reshape is layout-preserving.
        h_ref[...] = hm.reshape(BH * W8, Cin).astype(jnp.bfloat16)

    # Pointwise 1x1 conv == channel matmul (MXU, bf16 in / f32 acc),
    # then folded BN2 bias + ReLU; emit bf16 activations.
    h2 = jnp.dot(h_ref[...], wpw_ref[...], preferred_element_type=jnp.float32)
    h2 = jnp.maximum(h2 + b2_ref[...], 0.0)
    out = h2.astype(o_ref.dtype).reshape(BH, W8, -1)
    o_ref[0] = out[:, :W, :] if W8 != W else out


def conv_dw_forward(x_nchw, params, stride=1, eps=1e-5):
    """Pallas forward for Conv_DW (eval-mode BatchNorm). x_nchw: (N, Cin, H, W)."""
    # TODO(synk): stride > 1 depthwise path not implemented (module default is 1).
    assert stride == 1
    (w_dw, gamma1, beta1, mean1, var1,
     w_pw, gamma2, beta2, mean2, var2) = params

    N, Cin, H, W = x_nchw.shape
    Cout = w_pw.shape[0]

    # Fold BN (eval mode / running stats) into per-channel scale & bias; fold
    # the scales into the conv weights so the kernel only adds biases.
    s1 = gamma1 / jnp.sqrt(var1 + eps)
    b1 = beta1 - mean1 * s1
    s2 = gamma2 / jnp.sqrt(var2 + eps)
    b2 = beta2 - mean2 * s2

    # torch depthwise weight (Cin, 1, 3, 3) -> (9, Cin), BN1 scale folded in.
    wdw = (jnp.transpose(w_dw[:, 0, :, :], (1, 2, 0)).reshape(9, Cin)
           * s1[None, :]).astype(jnp.float32)
    # torch pointwise weight (Cout, Cin, 1, 1) -> (Cin, Cout), BN2 scale folded
    # in, bf16 for the MXU.
    wpw = (jnp.transpose(w_pw[:, :, 0, 0], (1, 0)) * s2[None, :]).astype(jnp.bfloat16)

    # NCHW -> NHWC in bf16 (cast folded into the pad producer -> half the HBM
    # bytes of the materialized copy).  Pad H by 1 (halo); pad W by 1 on the
    # left and with zeros on the right so depthwise can be computed over
    # W8 = round_up(W, 8) columns (keeps in-kernel reshapes layout-preserving).
    # TODO(synk): if the surrounding network is NHWC, both wrapper transposes
    # (and this padded copy) can be dropped / DMA'd as halo'd row bands.
    W8 = _round_up(W, 8)
    Wp = W8 + 8
    x = jnp.transpose(x_nchw, (0, 2, 3, 1)).astype(jnp.bfloat16)
    xp = jnp.pad(x, ((0, 0), (1, 1), (1, Wp - W - 1), (0, 0)))

    # Generation sniffing (safe fallbacks if unknown).
    try:
        kind = jax.devices()[0].device_kind.lower()
    except Exception:
        kind = ""
    is_v5 = "v5" in kind
    is_v7 = ("v7" in kind) or ("7x" in kind)

    # Cout tiling: big tiles on 128-MiB parts (fewer j steps), 128 on v5e.
    if (not is_v5) and (not is_v7) and Cout % 512 == 0:
        tc = 512
    elif (not is_v5) and Cout % 256 == 0:
        tc = 256
    elif Cout % 128 == 0:
        tc = 128
    else:
        tc = Cout
    nj = Cout // tc

    # H-band tiling: bounds per-step blocks/scratch (v7x 64 MiB VMEM) and adds
    # a second parallel grid axis when N is small.
    if H <= 32 or H % 8 != 0:
        BH = H
    elif H % 16 == 0:
        BH = 16
    else:
        BH = 8
    nhb = H // BH

    # Scoped-VMEM budget: double-buffered blocks + scratch + in-kernel f32
    # temporaries + headroom, clamped per generation.
    x_bytes = (H + 2) * Wp * Cin * 2
    o_bytes = BH * W * tc * 2
    w_bytes = 9 * Cin * 4 + Cin * 4 + Cin * tc * 2 + tc * 4
    h_bytes = BH * W8 * Cin * 2
    tmp_bytes = (BH + 2) * Wp * Cin * 4 + BH * W8 * Cin * 4 + BH * W8 * tc * 4
    est = 2 * (x_bytes + o_bytes + w_bytes) + h_bytes + tmp_bytes + (1 << 20)
    cap = (52 if is_v7 else 100) * 1024 * 1024
    vmem_limit = int(min(max(est, 32 * 1024 * 1024), cap))

    roll_sign = _roll_sign(BH + 2, Wp, Cin)
    kernel = functools.partial(_conv_dw_kernel, BH, W, W8, Wp, Cin, roll_sign)

    out_nhwc = pl.pallas_call(
        kernel,
        out_shape=jax.ShapeDtypeStruct((N, H, W, Cout), jnp.bfloat16),
        grid=(N, nhb, nj),
        in_specs=[
            pl.BlockSpec((1, H + 2, Wp, Cin), lambda n, hb, j: (n, 0, 0, 0)),
            pl.BlockSpec((9, Cin), lambda n, hb, j: (0, 0)),
            pl.BlockSpec((1, Cin), lambda n, hb, j: (0, 0)),
            pl.BlockSpec((Cin, tc), lambda n, hb, j: (0, j)),
            pl.BlockSpec((1, tc), lambda n, hb, j: (0, j)),
        ],
        out_specs=pl.BlockSpec((1, BH, W, tc), lambda n, hb, j: (n, hb, 0, j)),
        scratch_shapes=[pltpu.VMEM((BH * W8, Cin), jnp.bfloat16)],
        compiler_params=pltpu.CompilerParams(
            # Cout-tile axis must stay "arbitrary" (innermost) for the h_ref
            # scratch caching to be correct.
            dimension_semantics=("parallel", "parallel", "arbitrary"),
            vmem_limit_bytes=vmem_limit),
    )(xp, wdw, b1.reshape(1, Cin).astype(jnp.float32), wpw,
      b2.reshape(1, Cout).astype(jnp.float32))

    # TODO(synk): skip this transpose entirely if the consumer accepts NHWC.
    return jnp.transpose(out_nhwc, (0, 3, 1, 2))


def conv_dw_reference(x_nchw, params, eps=1e-5):
    """Pure-JAX (f32) reference matching the PyTorch eval-mode forward."""
    (w_dw, gamma1, beta1, mean1, var1,
     w_pw, gamma2, beta2, mean2, var2) = params
    Cin = x_nchw.shape[1]

    def bn(x, g, b, m, v):
        return ((x - m[None, :, None, None])
                / jnp.sqrt(v[None, :, None, None] + eps)
                * g[None, :, None, None] + b[None, :, None, None])

    out = lax.conv_general_dilated(
        x_nchw, w_dw, window_strides=(1, 1), padding=((1, 1), (1, 1)),
        feature_group_count=Cin,
        dimension_numbers=("NCHW", "OIHW", "NCHW"))
    out = jnp.maximum(bn(out, gamma1, beta1, mean1, var1), 0.0)
    out = lax.conv_general_dilated(
        out, w_pw, window_strides=(1, 1), padding=((0, 0), (0, 0)),
        dimension_numbers=("NCHW", "OIHW", "NCHW"))
    out = jnp.maximum(bn(out, gamma2, beta2, mean2, var2), 0.0)
    return out


def init_params(key, in_planes, opt_planes):
    ks = jax.random.split(key, 8)
    # conv1: depthwise, torch shape (in_planes, 1, 3, 3)
    w_dw = jax.random.normal(ks[0], (in_planes, 1, 3, 3), jnp.float32) * 0.3
    # conv2: pointwise, torch shape (opt_planes, in_planes, 1, 1)
    w_pw = jax.random.normal(ks[1], (opt_planes, in_planes, 1, 1),
                             jnp.float32) * 0.3
    # BN params (deterministic, non-trivial)
    gamma1 = 1.0 + 0.1 * jax.random.normal(ks[2], (in_planes,), jnp.float32)
    beta1 = 0.1 * jax.random.normal(ks[3], (in_planes,), jnp.float32)
    mean1 = 0.05 * jax.random.normal(ks[4], (in_planes,), jnp.float32)
    var1 = 1.0 + 0.1 * jax.random.uniform(ks[5], (in_planes,), jnp.float32)
    gamma2 = 1.0 + 0.1 * jax.random.normal(ks[6], (opt_planes,), jnp.float32)
    beta2 = 0.1 * jax.random.normal(ks[7], (opt_planes,), jnp.float32)
    mean2 = jnp.zeros((opt_planes,), jnp.float32)
    var2 = jnp.ones((opt_planes,), jnp.float32)
    return (w_dw, gamma1, beta1, mean1, var1,
            w_pw, gamma2, beta2, mean2, var2)


if __name__ == "__main__":
    N, in_planes, opt_planes, H, W = 2, 4, 8, 16, 16

    key = jax.random.PRNGKey(0)
    k_x, k_p = jax.random.split(key)
    x = jax.random.normal(k_x, (N, in_planes, H, W), jnp.float32)
    params = init_params(k_p, in_planes, opt_planes)

    out = conv_dw_forward(x, params)
    out = jax.block_until_ready(out)

    ref = conv_dw_reference(x, params)
    assert out.shape == (N, opt_planes, H, W)
    # x / h / pointwise weights / output are bf16 (f32 accumulation), so
    # compare at bf16-level tolerance against the pure-f32 reference.
    out_f32 = out.astype(jnp.float32)
    err = jnp.max(jnp.abs(out_f32 - ref))
    assert jnp.allclose(out_f32, ref, rtol=5e-2, atol=5e-2), (
        f"max abs err = {err}")

    print("KERNEL_OK")
</pallas_src>

<mosaic_0001>
module attributes {stable_mosaic.version = 11 : i64} {
  func.func @k(%arg0: memref<18x24x4xf32, #tpu.memory_space<vmem>>, %arg1: memref<18x24x4xf32, #tpu.memory_space<vmem>>) attributes {dimension_semantics = [], scalar_prefetch = 0 : i64, scratch_operands = 0 : i64, tpu.core_type = #tpu.core_type<tc>} {
    %c0 = arith.constant 0 : index
    %c0_0 = arith.constant 0 : index
    %c0_1 = arith.constant 0 : index
    %0 = vector.load %arg0[%c0, %c0_0, %c0_1] : memref<18x24x4xf32, #tpu.memory_space<vmem>>, vector<18x24x4xf32>
    %c23_i32 = arith.constant 23 : i32
    %1 = tpu.dynamic_rotate %0 by %c23_i32 dim 1 : vector<18x24x4xf32>, i32 -> vector<18x24x4xf32>
    %c0_2 = arith.constant 0 : index
    %c0_3 = arith.constant 0 : index
    %c0_4 = arith.constant 0 : index
    %2 = vector.load %arg1[%c0_2, %c0_3, %c0_4] : memref<18x24x4xf32, #tpu.memory_space<vmem>>, vector<18x24x4xf32>
    tpu.vector_store %arg1[%c0_2, %c0_3, %c0_4], %1 {strides = array<i32>} : memref<18x24x4xf32, #tpu.memory_space<vmem>>, vector<18x24x4xf32>,
    return
  }
}

module attributes {stable_mosaic.version = 11 : i64} {
  func.func @_conv_dw_kernel(%arg0: i32, %arg1: i32, %arg2: i32, %arg3: memref<1x18x24x4xbf16, #tpu.memory_space<vmem>>, %arg4: memref<9x4xf32, #tpu.memory_space<vmem>>, %arg5: memref<1x4xf32, #tpu.memory_space<vmem>>, %arg6: memref<4x8xbf16, #tpu.memory_space<vmem>>, %arg7: memref<1x8xf32, #tpu.memory_space<vmem>>, %arg8: memref<1x16x16x8xbf16, #tpu.memory_space<vmem>>, %arg9: memref<256x4xbf16, #tpu.memory_space<vmem>>) attributes {dimension_semantics = [#tpu.dimension_semantics<parallel>, #tpu.dimension_semantics<parallel>, #tpu.dimension_semantics<arbitrary>], iteration_bounds = array<i64: 2, 1, 1>, scalar_prefetch = 0 : i64, scratch_operands = 1 : i64, tpu.core_type = #tpu.core_type<tc>, window_params = [{transform_indices = @transform_0, window_bounds = array<i64: 1, 18, 24, 4>}, {pipeline_mode = #tpu.pipeline_mode<synchronous>, transform_indices = @transform_1, window_bounds = array<i64: 9, 4>}, {pipeline_mode = #tpu.pipeline_mode<synchronous>, transform_indices = @transform_2, window_bounds = array<i64: 1, 4>}, {transform_indices = @transform_3, window_bounds = array<i64: 4, 8>}, {transform_indices = @transform_4, window_bounds = array<i64: 1, 8>}, {transform_indices = @transform_5, window_bounds = array<i64: 1, 16, 16, 8>}]} {
    %c0_i32 = arith.constant 0 : i32
    %0 = arith.cmpi eq, %arg2, %c0_i32 : i32
    %1 = arith.extui %0 : i1 to i32
    %c0_i32_0 = arith.constant 0 : i32
    %2 = arith.cmpi ne, %1, %c0_i32_0 : i32
    scf.if %2 {
      %c16_i32 = arith.constant 16 : i32
      %16 = arith.muli %arg1, %c16_i32 : i32
      %17 = tpu.assume_multiple %16, 8 : i32
      %c0_11 = arith.constant 0 : index
      %18 = arith.index_cast %17 : i32 to index
      %c0_12 = arith.constant 0 : index
      %c0_13 = arith.constant 0 : index
      %19 = vector.load %arg3[%c0_11, %18, %c0_12, %c0_13] : memref<1x18x24x4xbf16, #tpu.memory_space<vmem>>, vector<1x18x24x4xbf16>
      %20 = vector.shape_cast %19 : vector<1x18x24x4xbf16> to vector<18x24x4xbf16>
      %21 = arith.extf %20 : vector<18x24x4xbf16> to vector<18x24x4xf32>
      %c0_14 = arith.constant 0 : index
      %c0_15 = arith.constant 0 : index
      %22 = vector.load %arg4[%c0_14, %c0_15] : memref<9x4xf32, #tpu.memory_space<vmem>>, vector<9x4xf32>
      %23 = vector.extract_strided_slice %21 {offsets = [0, 0, 0], sizes = [18, 16, 4], strides = [1, 1, 1]} : vector<18x24x4xf32> to vector<18x16x4xf32>
      %24 = vector.extract_strided_slice %22 {offsets = [0, 0], sizes = [1, 4], strides = [1, 1]} : vector<9x4xf32> to vector<1x4xf32>
      %25 = vector.shape_cast %24 : vector<1x4xf32> to vector<4xf32>
      %26 = vector.shape_cast %25 : vector<4xf32> to vector<1x1x4xf32>
      %27 = vector.extract_strided_slice %23 {offsets = [0, 0, 0], sizes = [16, 16, 4], strides = [1, 1, 1]} : vector<18x16x4xf32> to vector<16x16x4xf32>
      %28 = vector.broadcast %26 : vector<1x1x4xf32> to vector<16x16x4xf32>
      %29 = arith.mulf %27, %28 : vector<16x16x4xf32>
      %30 = vector.extract_strided_slice %22 {offsets = [3, 0], sizes = [1, 4], strides = [1, 1]} : vector<9x4xf32> to vector<1x4xf32>
      %31 = vector.shape_cast %30 : vector<1x4xf32> to vector<4xf32>
      %32 = vector.shape_cast %31 : vector<4xf32> to vector<1x1x4xf32>
      %33 = vector.extract_strided_slice %23 {offsets = [1, 0, 0], sizes = [16, 16, 4], strides = [1, 1, 1]} : vector<18x16x4xf32> to vector<16x16x4xf32>
      %34 = vector.broadcast %32 : vector<1x1x4xf32> to vector<16x16x4xf32>
      %35 = arith.mulf %33, %34 : vector<16x16x4xf32>
      %36 = arith.addf %29, %35 : vector<16x16x4xf32>
      %37 = vector.extract_strided_slice %22 {offsets = [6, 0], sizes = [1, 4], strides = [1, 1]} : vector<9x4xf32> to vector<1x4xf32>
      %38 = vector.shape_cast %37 : vector<1x4xf32> to vector<4xf32>
      %39 = vector.shape_cast %38 : vector<4xf32> to vector<1x1x4xf32>
      %40 = vector.extract_strided_slice %23 {offsets = [2, 0, 0], sizes = [16, 16, 4], strides = [1, 1, 1]} : vector<18x16x4xf32> to vector<16x16x4xf32>
      %41 = vector.broadcast %39 : vector<1x1x4xf32> to vector<16x16x4xf32>
      %42 = arith.mulf %40, %41 : vector<16x16x4xf32>
      %43 = arith.addf %36, %42 : vector<16x16x4xf32>
      %44 = vector.extract_strided_slice %21 {offsets = [0, 1, 0], sizes = [18, 16, 4], strides = [1, 1, 1]} : vector<18x24x4xf32> to vector<18x16x4xf32>
      %45 = vector.extract_strided_slice %22 {offsets = [1, 0], sizes = [1, 4], strides = [1, 1]} : vector<9x4xf32> to vector<1x4xf32>
      %46 = vector.shape_cast %45 : vector<1x4xf32> to vector<4xf32>
      %47 = vector.shape_cast %46 : vector<4xf32> to vector<1x1x4xf32>
      %48 = vector.extract_strided_slice %44 {offsets = [0, 0, 0], sizes = [16, 16, 4], strides = [1, 1, 1]} : vector<18x16x4xf32> to vector<16x16x4xf32>
      %49 = vector.broadcast %47 : vector<1x1x4xf32> to vector<16x16x4xf32>
      %50 = arith.mulf %48, %49 : vector<16x16x4xf32>
      %51 = arith.addf %43, %50 : vector<16x16x4xf32>
      %52 = vector.extract_strided_slice %22 {offsets = [4, 0], sizes = [1, 4], strides = [1, 1]} : vector<9x4xf32> to vector<1x4xf32>
      %53 = vector.shape_cast %52 : vector<1x4xf32> to vector<4xf32>
      %54 = vector.shape_cast %53 : vector<4xf32> to vector<1x1x4xf32>
      %55 = vector.extract_strided_slice %44 {offsets = [1, 0, 0], sizes = [16, 16, 4], strides = [1, 1, 1]} : vector<18x16x4xf32> to vector<16x16x4xf32>
      %56 = vector.broadcast %54 : vector<1x1x4xf32> to vector<16x16x4xf32>
      %57 = arith.mulf %55, %56 : vector<16x16x4xf32>
      %58 = arith.addf %51, %57 : vector<16x16x4xf32>
      %59 = vector.extract_strided_slice %22 {offsets = [7, 0], sizes = [1, 4], strides = [1, 1]} : vector<9x4xf32> to vector<1x4xf32>
      %60 = vector.shape_cast %59 : vector<1x4xf32> to vector<4xf32>
      %61 = vector.shape_cast %60 : vector<4xf32> to vector<1x1x4xf32>
      %62 = vector.extract_strided_slice %44 {offsets = [2, 0, 0], sizes = [16, 16, 4], strides = [1, 1, 1]} : vector<18x16x4xf32> to vector<16x16x4xf32>
      %63 = vector.broadcast %61 : vector<1x1x4xf32> to vector<16x16x4xf32>
      %64 = arith.mulf %62, %63 : vector<16x16x4xf32>
      %65 = arith.addf %58, %64 : vector<16x16x4xf32>
      %66 = vector.extract_strided_slice %21 {offsets = [0, 2, 0], sizes = [18, 16, 4], strides = [1, 1, 1]} : vector<18x24x4xf32> to vector<18x16x4xf32>
      %67 = vector.extract_strided_slice %22 {offsets = [2, 0], sizes = [1, 4], strides = [1, 1]} : vector<9x4xf32> to vector<1x4xf32>
      %68 = vector.shape_cast %67 : vector<1x4xf32> to vector<4xf32>
      %69 = vector.shape_cast %68 : vector<4xf32> to vector<1x1x4xf32>
      %70 = vector.extract_strided_slice %66 {offsets = [0, 0, 0], sizes = [16, 16, 4], strides = [1, 1, 1]} : vector<18x16x4xf32> to vector<16x16x4xf32>
      %71 = vector.broadcast %69 : vector<1x1x4xf32> to vector<16x16x4xf32>
      %72 = arith.mulf %70, %71 : vector<16x16x4xf32>
      %73 = arith.addf %65, %72 : vector<16x16x4xf32>
      %74 = vector.extract_strided_slice %22 {offsets = [5, 0], sizes = [1, 4], strides = [1, 1]} : vector<9x4xf32> to vector<1x4xf32>
      %75 = vector.shape_cast %74 : vector<1x4xf32> to vector<4xf32>
      %76 = vector.shape_cast %75 : vector<4xf32> to vector<1x1x4xf32>
      %77 = vector.extract_strided_slice %66 {offsets = [1, 0, 0], sizes = [16, 16, 4], strides = [1, 1, 1]} : vector<18x16x4xf32> to vector<16x16x4xf32>
      %78 = vector.broadcast %76 : vector<1x1x4xf32> to vector<16x16x4xf32>
      %79 = arith.mulf %77, %78 : vector<16x16x4xf32>
      %80 = arith.addf %73, %79 : vector<16x16x4xf32>
      %81 = vector.extract_strided_slice %22 {offsets = [8, 0], sizes = [1, 4], strides = [1, 1]} : vector<9x4xf32> to vector<1x4xf32>
      %82 = vector.shape_cast %81 : vector<1x4xf32> to vector<4xf32>
      %83 = vector.shape_cast %82 : vector<4xf32> to vector<1x1x4xf32>
      %84 = vector.extract_strided_slice %66 {offsets = [2, 0, 0], sizes = [16, 16, 4], strides = [1, 1, 1]} : vector<18x16x4xf32> to vector<16x16x4xf32>
      %85 = vector.broadcast %83 : vector<1x1x4xf32> to vector<16x16x4xf32>
      %86 = arith.mulf %84, %85 : vector<16x16x4xf32>
      %87 = arith.addf %80, %86 : vector<16x16x4xf32>
      %c0_16 = arith.constant 0 : index
      %c0_17 = arith.constant 0 : index
      %88 = vector.load %arg5[%c0_16, %c0_17] : memref<1x4xf32, #tpu.memory_space<vmem>>, vector<1x4xf32>
      %89 = vector.shape_cast %88 : vector<1x4xf32> to vector<1x1x4xf32>
      %90 = vector.broadcast %89 : vector<1x1x4xf32> to vector<16x16x4xf32>
      %91 = arith.addf %87, %90 : vector<16x16x4xf32>
      %cst_18 = arith.constant 0.000000e+00 : f32
      %92 = vector.broadcast %cst_18 : f32 to vector<16x16x4xf32>
      %93 = arith.maximumf %91, %92 : vector<16x16x4xf32>
      %94 = vector.shape_cast %93 : vector<16x16x4xf32> to vector<256x4xf32>
      %95 = arith.truncf %94 : vector<256x4xf32> to vector<256x4xbf16>
      %c0_19 = arith.constant 0 : index
      %c0_20 = arith.constant 0 : index
      %96 = vector.load %arg9[%c0_19, %c0_20] : memref<256x4xbf16, #tpu.memory_space<vmem>>, vector<256x4xbf16>
      tpu.vector_store %arg9[%c0_19, %c0_20], %95 {strides = array<i32>} : memref<256x4xbf16, #tpu.memory_space<vmem>>, vector<256x4xbf16>,
    } else {
    }
    %c0 = arith.constant 0 : index
    %c0_1 = arith.constant 0 : index
    %3 = vector.load %arg9[%c0, %c0_1] : memref<256x4xbf16, #tpu.memory_space<vmem>>, vector<256x4xbf16>
    %c0_2 = arith.constant 0 : index
    %c0_3 = arith.constant 0 : index
    %4 = vector.load %arg6[%c0_2, %c0_3] : memref<4x8xbf16, #tpu.memory_space<vmem>>, vector<4x8xbf16>
    %cst = arith.constant dense<0.000000e+00> : vector<256x8xf32>
    %5 = tpu.matmul %3, %4, %cst {dimension_numbers = #tpu.dot_dimension_numbers<[1], [0], [0], [1], [0, 0, 1, 1], [], []>} : vector<256x4xbf16>, vector<4x8xbf16>, vector<256x8xf32> -> vector<256x8xf32>
    %c0_4 = arith.constant 0 : index
    %c0_5 = arith.constant 0 : index
    %6 = vector.load %arg7[%c0_4, %c0_5] : memref<1x8xf32, #tpu.memory_space<vmem>>, vector<1x8xf32>
    %7 = vector.broadcast %6 : vector<1x8xf32> to vector<256x8xf32>
    %8 = arith.addf %5, %7 : vector<256x8xf32>
    %cst_6 = arith.constant 0.000000e+00 : f32
    %9 = vector.broadcast %cst_6 : f32 to vector<256x8xf32>
    %10 = arith.maximumf %8, %9 : vector<256x8xf32>
    %11 = arith.truncf %10 : vector<256x8xf32> to vector<256x8xbf16>
    %12 = vector.shape_cast %11 : vector<256x8xbf16> to vector<16x16x8xbf16>
    %c0_7 = arith.constant 0 : index
    %c0_8 = arith.constant 0 : index
    %c0_9 = arith.constant 0 : index
    %c0_10 = arith.constant 0 : index
    %13 = vector.load %arg8[%c0_7, %c0_8, %c0_9, %c0_10] : memref<1x16x16x8xbf16, #tpu.memory_space<vmem>>, vector<1x16x16x8xbf16>
    %14 = vector.shape_cast %13 : vector<1x16x16x8xbf16> to vector<16x16x8xbf16>
    %15 = vector.shape_cast %12 : vector<16x16x8xbf16> to vector<1x16x16x8xbf16>
    tpu.vector_store %arg8[%c0_7, %c0_8, %c0_9, %c0_10], %15 {strides = array<i32>} : memref<1x16x16x8xbf16, #tpu.memory_space<vmem>>, vector<1x16x16x8xbf16>,
    return
  }
  func.func @transform_0(%arg0: i32, %arg1: i32, %arg2: i32) -> (i32, i32, i32, i32) {
    %c0_i32 = arith.constant 0 : i32
    %c0_i32_0 = arith.constant 0 : i32
    %c0_i32_1 = arith.constant 0 : i32
    %c0_i32_2 = arith.constant 0 : i32
    return %arg0, %c0_i32, %c0_i32_0, %c0_i32_1 : i32, i32, i32, i32
  }
  func.func @transform_1(%arg0: i32, %arg1: i32, %arg2: i32) -> (i32, i32) {
    %c0_i32 = arith.constant 0 : i32
    %c0_i32_0 = arith.constant 0 : i32
    %c0_i32_1 = arith.constant 0 : i32
    return %c0_i32, %c0_i32_0 : i32, i32
  }
  func.func @transform_2(%arg0: i32, %arg1: i32, %arg2: i32) -> (i32, i32) {
    %c0_i32 = arith.constant 0 : i32
    %c0_i32_0 = arith.constant 0 : i32
    %c0_i32_1 = arith.constant 0 : i32
    return %c0_i32, %c0_i32_0 : i32, i32
  }
  func.func @transform_3(%arg0: i32, %arg1: i32, %arg2: i32) -> (i32, i32) {
    %c0_i32 = arith.constant 0 : i32
    %c0_i32_0 = arith.constant 0 : i32
    return %c0_i32, %arg2 : i32, i32
  }
  func.func @transform_4(%arg0: i32, %arg1: i32, %arg2: i32) -> (i32, i32) {
    %c0_i32 = arith.constant 0 : i32
    %c0_i32_0 = arith.constant 0 : i32
    return %c0_i32, %arg2 : i32, i32
  }
  func.func @transform_5(%arg0: i32, %arg1: i32, %arg2: i32) -> (i32, i32, i32, i32) {
    %c0_i32 = arith.constant 0 : i32
    %c0_i32_0 = arith.constant 0 : i32
    return %arg0, %arg1, %c0_i32, %arg2 : i32, i32, i32, i32
  }
}

</mosaic_0001>

<llo_original>
// kernel: tpu_custom_call.1
$region0: #{tpu_custom_call.1}
  #allocation0 [shape = 'u32[]', space=smem, size = 0x4, offset = 0x4, fixed_abs, tag = 'smem constant byte address 0x4 - core index']
  #allocation1 [shape = 'u32[72,128]{1,0:T(1,128)}', space=vmem, size = 0x9000, scoped, tag = 'internal scratch']
  %s0 = inlined_call_operand.vmem [shape: f32[18,24,4], index: 0, kind: input, shape index: {}]
  %s1 = inlined_call_operand.vmem [shape: f32[18,24,4], index: 1, kind: output, shape index: {}]
  %s2 = sld [smem:[#allocation0]]
  $region14: #{tpu_custom_call.1} parent=0
    _
  %s4 = ssub.s32 1, %s2
  %s5 = scalar_select 0, %s4, %s2
  // Predicated region
  $region2: #{tpu_custom_call.1} parent=0 // pred_check
    _
  $region3: #{tpu_custom_call.1} parent=0 // pred_check_branch
    %7 = sbr.rel (0) target = $region5
  $region4: #{tpu_custom_call.1} parent=0 // pred_region
    _
  $region5: #{tpu_custom_call.1} parent=0 // pred_fallthru
    _
  %v8 = vld [vmem:[%s0] sm:$0xff]
  %v9 = vld [vmem:[%s0 + $0x8] sm:$0xff]
  %v10 = vld [vmem:[%s0 + $0x10] sm:$0xff]
  %v11 = vld [vmem:[%s0 + $0x18] sm:$0xff]
  %v12 = vld [vmem:[%s0 + $0x20] sm:$0xff]
  %v13 = vld [vmem:[%s0 + $0x28] sm:$0xff]
  %v14 = vld [vmem:[%s0 + $0x30] sm:$0xff]
  %v15 = vld [vmem:[%s0 + $0x38] sm:$0xff]
  %v16 = vld [vmem:[%s0 + $0x40] sm:$0xff]
  %v17 = vld [vmem:[%s0 + $0x48] sm:$0xff]
  %v18 = vld [vmem:[%s0 + $0x50] sm:$0xff]
  %v19 = vld [vmem:[%s0 + $0x58] sm:$0xff]
  %v20 = vld [vmem:[%s0 + $0x60] sm:$0xff]
  %v21 = vld [vmem:[%s0 + $0x68] sm:$0xff]
  %v22 = vld [vmem:[%s0 + $0x70] sm:$0xff]
  %v23 = vld [vmem:[%s0 + $0x78] sm:$0xff]
  %v24 = vld [vmem:[%s0 + $0x80] sm:$0xff]
  %v25 = vld [vmem:[%s0 + $0x88] sm:$0xff]
  %v26 = vld [vmem:[%s0 + $0x90] sm:$0xff]
  %v27 = vld [vmem:[%s0 + $0x98] sm:$0xff]
  %v28 = vld [vmem:[%s0 + $0xa0] sm:$0xff]
  %v29 = vld [vmem:[%s0 + $0xa8] sm:$0xff]
  %v30 = vld [vmem:[%s0 + $0xb0] sm:$0xff]
  %v31 = vld [vmem:[%s0 + $0xb8] sm:$0xff]
  %v32 = vld [vmem:[%s0 + $0xc0] sm:$0xff]
  %v33 = vld [vmem:[%s0 + $0xc8] sm:$0xff]
  %v34 = vld [vmem:[%s0 + $0xd0] sm:$0xff]
  %v35 = vld [vmem:[%s0 + $0xd8] sm:$0xff]
  %v36 = vld [vmem:[%s0 + $0xe0] sm:$0xff]
  %v37 = vld [vmem:[%s0 + $0xe8] sm:$0xff]
  %v38 = vld [vmem:[%s0 + $0xf0] sm:$0xff]
  %v39 = vld [vmem:[%s0 + $0xf8] sm:$0xff]
  %v40 = vld [vmem:[%s0 + $0x100] sm:$0xff]
  %v41 = vld [vmem:[%s0 + $0x108] sm:$0xff]
  %v42 = vld [vmem:[%s0 + $0x110] sm:$0xff]
  %v43 = vld [vmem:[%s0 + $0x118] sm:$0xff]
  %v44 = vld [vmem:[%s0 + $0x120] sm:$0xff]
  %v45 = vld [vmem:[%s0 + $0x128] sm:$0xff]
  %v46 = vld [vmem:[%s0 + $0x130] sm:$0xff]
  %v47 = vld [vmem:[%s0 + $0x138] sm:$0xff]
  %v48 = vld [vmem:[%s0 + $0x140] sm:$0xff]
  %v49 = vld [vmem:[%s0 + $0x148] sm:$0xff]
  %v50 = vld [vmem:[%s0 + $0x150] sm:$0xff]
  %v51 = vld [vmem:[%s0 + $0x158] sm:$0xff]
  %v52 = vld [vmem:[%s0 + $0x160] sm:$0xff]
  %v53 = vld [vmem:[%s0 + $0x168] sm:$0xff]
  %v54 = vld [vmem:[%s0 + $0x170] sm:$0xff]
  %v55 = vld [vmem:[%s0 + $0x178] sm:$0xff]
  %v56 = vld [vmem:[%s0 + $0x180] sm:$0xff]
  %v57 = vld [vmem:[%s0 + $0x188] sm:$0xff]
  %v58 = vld [vmem:[%s0 + $0x190] sm:$0xff]
  %v59 = vld [vmem:[%s0 + $0x198] sm:$0xff]
  %v60 = vld [vmem:[%s0 + $0x1a0] sm:$0xff]
  %v61 = vld [vmem:[%s0 + $0x1a8] sm:$0xff]
  %v62 = vrot.slane %v8, 1
  %v63 = vrot.slane %v11, 1
  %v64 = vrot.slane %v14, 1
  %v65 = vrot.slane %v17, 1
  %v66 = vrot.slane %v20, 1
  %v67 = vrot.slane %v23, 1
  %v68 = vrot.slane %v26, 1
  %v69 = vrot.slane %v29, 1
  %v70 = vrot.slane %v32, 1
  %v71 = vrot.slane %v35, 1
  %v72 = vrot.slane %v38, 1
  %v73 = vrot.slane %v41, 1
  %v74 = vrot.slane %v44, 1
  %v75 = vrot.slane %v47, 1
  %v76 = vrot.slane %v50, 1
  %v77 = vrot.slane %v53, 1
  %v78 = vrot.slane %v56, 1
  %v79 = vrot.slane %v59, 1
  %v80 = vrot.slane %v9, 1
  %v81 = vrot.slane %v12, 1
  %v82 = vrot.slane %v15, 1
  %v83 = vrot.slane %v18, 1
  %v84 = vrot.slane %v21, 1
  %v85 = vrot.slane %v24, 1
  %v86 = vrot.slane %v27, 1
  %v87 = vrot.slane %v30, 1
  %v88 = vrot.slane %v33, 1
  %v89 = vrot.slane %v36, 1
  %v90 = vrot.slane %v39, 1
  %v91 = vrot.slane %v42, 1
  %v92 = vrot.slane %v45, 1
  %v93 = vrot.slane %v48, 1
  %v94 = vrot.slane %v51, 1
  %v95 = vrot.slane %v54, 1
  %v96 = vrot.slane %v57, 1
  %v97 = vrot.slane %v60, 1
  %v98 = vrot.slane %v10, 1
  %v99 = vrot.slane %v13, 1
  %v100 = vrot.slane %v16, 1
  %v101 = vrot.slane %v19, 1
  %v102 = vrot.slane %v22, 1
  %v103 = vrot.slane %v25, 1
  %v104 = vrot.slane %v28, 1
  %v105 = vrot.slane %v31, 1
  %v106 = vrot.slane %v34, 1
  %v107 = vrot.slane %v37, 1
  %v108 = vrot.slane %v40, 1
  %v109 = vrot.slane %v43, 1
  %v110 = vrot.slane %v46, 1
  %v111 = vrot.slane %v49, 1
  %v112 = vrot.slane %v52, 1
  %v113 = vrot.slane %v55, 1
  %v114 = vrot.slane %v58, 1
  %v115 = vrot.slane %v61, 1
  %v116 = vlaneseq
  %v117 = vshrl.u32 %v116, 7
  %vm118 = vcmp.lt.s32.totalorder %v117, 7
  %v119 = vsel %vm118, %v80, %v98
  %v120 = vsel %vm118, %v81, %v99
  %v121 = vsel %vm118, %v82, %v100
  %v122 = vsel %vm118, %v83, %v101
  %v123 = vsel %vm118, %v84, %v102
  %v124 = vsel %vm118, %v85, %v103
  %v125 = vsel %vm118, %v86, %v104
  %v126 = vsel %vm118, %v87, %v105
  %v127 = vsel %vm118, %v88, %v106
  %v128 = vsel %vm118, %v89, %v107
  %v129 = vsel %vm118, %v90, %v108
  %v130 = vsel %vm118, %v91, %v109
  %v131 = vsel %vm118, %v92, %v110
  %v132 = vsel %vm118, %v93, %v111
  %v133 = vsel %vm118, %v94, %v112
  %v134 = vsel %vm118, %v95, %v113
  %v135 = vsel %vm118, %v96, %v114
  %v136 = vsel %vm118, %v97, %v115
  %v137 = vsel %vm118, %v62, %v80
  %v138 = vsel %vm118, %v63, %v81
  %v139 = vsel %vm118, %v64, %v82
  %v140 = vsel %vm118, %v65, %v83
  %v141 = vsel %vm118, %v66, %v84
  %v142 = vsel %vm118, %v67, %v85
  %v143 = vsel %vm118, %v68, %v86
  %v144 = vsel %vm118, %v69, %v87
  %v145 = vsel %vm118, %v70, %v88
  %v146 = vsel %vm118, %v71, %v89
  %v147 = vsel %vm118, %v72, %v90
  %v148 = vsel %vm118, %v73, %v91
  %v149 = vsel %vm118, %v74, %v92
  %v150 = vsel %vm118, %v75, %v93
  %v151 = vsel %vm118, %v76, %v94
  %v152 = vsel %vm118, %v77, %v95
  %v153 = vsel %vm118, %v78, %v96
  %v154 = vsel %vm118, %v79, %v97
  %v155 = vsel %vm118, %v98, %v62
  %v156 = vsel %vm118, %v99, %v63
  %v157 = vsel %vm118, %v100, %v64
  %v158 = vsel %vm118, %v101, %v65
  %v159 = vsel %vm118, %v102, %v66
  %v160 = vsel %vm118, %v103, %v67
  %v161 = vsel %vm118, %v104, %v68
  %v162 = vsel %vm118, %v105, %v69
  %v163 = vsel %vm118, %v106, %v70
  %v164 = vsel %vm118, %v107, %v71
  %v165 = vsel %vm118, %v108, %v72
  %v166 = vsel %vm118, %v109, %v73
  %v167 = vsel %vm118, %v110, %v74
  %v168 = vsel %vm118, %v111, %v75
  %v169 = vsel %vm118, %v112, %v76
  %v170 = vsel %vm118, %v113, %v77
  %v171 = vsel %vm118, %v114, %v78
  %v172 = vsel %vm118, %v115, %v79
  %vm173 = vcmask 31744
  %174 = vst.msk [vmem:[%s1] sm:$0xff] %vm173, %v137
  %175 = vst.msk [vmem:[%s1 + $0x8] sm:$0xff] %vm173, %v119
  %176 = vst.msk [vmem:[%s1 + $0x10] sm:$0xff] %vm173, %v155
  %177 = vst.msk [vmem:[%s1 + $0x18] sm:$0xff] %vm173, %v138
  %178 = vst.msk [vmem:[%s1 + $0x20] sm:$0xff] %vm173, %v120
  %179 = vst.msk [vmem:[%s1 + $0x28] sm:$0xff] %vm173, %v156
  %180 = vst.msk [vmem:[%s1 + $0x30] sm:$0xff] %vm173, %v139
  %181 = vst.msk [vmem:[%s1 + $0x38] sm:$0xff] %vm173, %v121
  %182 = vst.msk [vmem:[%s1 + $0x40] sm:$0xff] %vm173, %v157
  %183 = vst.msk [vmem:[%s1 + $0x48] sm:$0xff] %vm173, %v140
  %184 = vst.msk [vmem:[%s1 + $0x50] sm:$0xff] %vm173, %v122
  %185 = vst.msk [vmem:[%s1 + $0x58] sm:$0xff] %vm173, %v158
  %186 = vst.msk [vmem:[%s1 + $0x60] sm:$0xff] %vm173, %v141
  %187 = vst.msk [vmem:[%s1 + $0x68] sm:$0xff] %vm173, %v123
  %188 = vst.msk [vmem:[%s1 + $0x70] sm:$0xff] %vm173, %v159
  %189 = vst.msk [vmem:[%s1 + $0x78] sm:$0xff] %vm173, %v142
  %190 = vst.msk [vmem:[%s1 + $0x80] sm:$0xff] %vm173, %v124
  %191 = vst.msk [vmem:[%s1 + $0x88] sm:$0xff] %vm173, %v160
  %192 = vst.msk [vmem:[%s1 + $0x90] sm:$0xff] %vm173, %v143
  %193 = vst.msk [vmem:[%s1 + $0x98] sm:$0xff] %vm173, %v125
  %194 = vst.msk [vmem:[%s1 + $0xa0] sm:$0xff] %vm173, %v161
  %195 = vst.msk [vmem:[%s1 + $0xa8] sm:$0xff] %vm173, %v144
  %196 = vst.msk [vmem:[%s1 + $0xb0] sm:$0xff] %vm173, %v126
  %197 = vst.msk [vmem:[%s1 + $0xb8] sm:$0xff] %vm173, %v162
  %198 = vst.msk [vmem:[%s1 + $0xc0] sm:$0xff] %vm173, %v145
  %199 = vst.msk [vmem:[%s1 + $0xc8] sm:$0xff] %vm173, %v127
  %200 = vst.msk [vmem:[%s1 + $0xd0] sm:$0xff] %vm173, %v163
  %201 = vst.msk [vmem:[%s1 + $0xd8] sm:$0xff] %vm173, %v146
  %202 = vst.msk [vmem:[%s1 + $0xe0] sm:$0xff] %vm173, %v128
  %203 = vst.msk [vmem:[%s1 + $0xe8] sm:$0xff] %vm173, %v164
  %204 = vst.msk [vmem:[%s1 + $0xf0] sm:$0xff] %vm173, %v147
  %205 = vst.msk [vmem:[%s1 + $0xf8] sm:$0xff] %vm173, %v129
  %206 = vst.msk [vmem:[%s1 + $0x100] sm:$0xff] %vm173, %v165
  %207 = vst.msk [vmem:[%s1 + $0x108] sm:$0xff] %vm173, %v148
  %208 = vst.msk [vmem:[%s1 + $0x110] sm:$0xff] %vm173, %v130
  %209 = vst.msk [vmem:[%s1 + $0x118] sm:$0xff] %vm173, %v166
  %210 = vst.msk [vmem:[%s1 + $0x120] sm:$0xff] %vm173, %v149
  %211 = vst.msk [vmem:[%s1 + $0x128] sm:$0xff] %vm173, %v131
  %212 = vst.msk [vmem:[%s1 + $0x130] sm:$0xff] %vm173, %v167
  %213 = vst.msk [vmem:[%s1 + $0x138] sm:$0xff] %vm173, %v150
  %214 = vst.msk [vmem:[%s1 + $0x140] sm:$0xff] %vm173, %v132
  %215 = vst.msk [vmem:[%s1 + $0x148] sm:$0xff] %vm173, %v168
  %216 = vst.msk [vmem:[%s1 + $0x150] sm:$0xff] %vm173, %v151
  %217 = vst.msk [vmem:[%s1 + $0x158] sm:$0xff] %vm173, %v133
  %218 = vst.msk [vmem:[%s1 + $0x160] sm:$0xff] %vm173, %v169
  %219 = vst.msk [vmem:[%s1 + $0x168] sm:$0xff] %vm173, %v152
  %220 = vst.msk [vmem:[%s1 + $0x170] sm:$0xff] %vm173, %v134
  %221 = vst.msk [vmem:[%s1 + $0x178] sm:$0xff] %vm173, %v170
  %222 = vst.msk [vmem:[%s1 + $0x180] sm:$0xff] %vm173, %v153
  %223 = vst.msk [vmem:[%s1 + $0x188] sm:$0xff] %vm173, %v135
  %224 = vst.msk [vmem:[%s1 + $0x190] sm:$0xff] %vm173, %v171
  %225 = vst.msk [vmem:[%s1 + $0x198] sm:$0xff] %vm173, %v154
  %226 = vst.msk [vmem:[%s1 + $0x1a0] sm:$0xff] %vm173, %v136
  %227 = vst.msk [vmem:[%s1 + $0x1a8] sm:$0xff] %vm173, %v172
  // Predicated region
  $region6: #{tpu_custom_call.1} parent=0 // pred_check
    _
  $region7: #{tpu_custom_call.1} parent=0 // pred_check_branch
    %229 = sbr.rel (0) target = $region9
  $region8: #{tpu_custom_call.1} parent=0 // pred_region
    _
  $region9: #{tpu_custom_call.1} parent=0 // pred_fallthru
    _
  // Predicated region
  $region10: #{tpu_custom_call.1} parent=0 // pred_check
    _
  $region11: #{tpu_custom_call.1} parent=0 // pred_check_branch
    %231 = sbr.rel (0) target = $region13
  $region12: #{tpu_custom_call.1} parent=0 // pred_region
    _
  $region13: #{tpu_custom_call.1} parent=0 // pred_fallthru
    _

// kernel: tpu_custom_call.1
$region0: #{tpu_custom_call.1}
  #allocation0 [shape = 'u32[]', space=smem, size = 0x4, offset = 0x4, fixed_abs, tag = 'smem constant byte address 0x4 - core index']
  #allocation1 [shape = 'u32[72,128]{1,0:T(1,128)}', space=vmem, size = 0x9000, scoped, tag = 'internal scratch']
  #allocation2 [shape = 'bf16[256,4]{1,0:T(8,128)(2,1)}', space=vmem, size = 0x10000, scoped, tag = 'scratch operand']
  %s0 = inlined_call_operand.vmem [shape: bf16[2,18,24,4], index: 0, kind: input, shape index: {}]
  %s1 = inlined_call_operand.vmem [shape: f32[9,4], index: 1, kind: input, shape index: {}]
  %s2 = inlined_call_operand.vmem [shape: f32[1,4], index: 2, kind: input, shape index: {}]
  %s3 = inlined_call_operand.vmem [shape: bf16[4,8], index: 3, kind: input, shape index: {}]
  %s4 = inlined_call_operand.vmem [shape: f32[1,8], index: 4, kind: input, shape index: {}]
  %s5 = inlined_call_operand.vmem [shape: bf16[2,16,16,8], index: 5, kind: output, shape index: {}]
  %s6 = sld [smem:[#allocation0]]
  $region57: #{tpu_custom_call.1} parent=0
    _
  %s8 = ssub.s32 1, %s6
  %s9 = scalar_select 0, %s8, %s6
  loop: start=0, step=1, limit=4
  $region2: #{tpu_custom_call.1} parent=0 // loop_pre_header
    _
  $region3: #{tpu_custom_call.1} parent=0 // loop_header
    %s11 = sphi 0, %s15
    %p12 = scmp.ge.s32.totalorder %s11, 4
    %s18 = sphi 0, %s37
    %s19 = sphi 0, %s33
    %s20 = sphi 0, %s29
    %s21 = sphi 0, %s18
    %s22 = sphi 0, %s19
    %s23 = sphi 0, %s20
    %s24 = sphi 0, %s21
    %s25 = sphi 0, %s22
    %s26 = sphi 0, %s23
    %s40 = sphi 0, %s42
    %s43 = sphi 0, %s40
    %s44 = sphi 0, %s43
    %s60 = sphi 0, %s44
    %s64 = sphi 0, %s64
    %s66 = sphi 0, %s64
    %s67 = sphi 0, %s66
    %s81 = sphi 0, %s67
    %s85 = sphi 0, %s85
    %s87 = sphi 0, %s85
    %s88 = sphi 0, %s87
    %s102 = sphi 0, %s88
    %s108 = sphi 0, %s110
    %s111 = sphi 0, %s108
    %s112 = sphi 0, %s111
    %s128 = sphi 0, %s112
    %s134 = sphi 0, %s136
    %s137 = sphi 0, %s134
    %s138 = sphi 0, %s137
    %s154 = sphi 0, %s138
    %s164 = sphi 0, %s166
    %s167 = sphi 0, %s164
    %s168 = sphi 0, %s167
    %s184 = sphi 0, %s168
  $region4: #{tpu_custom_call.1} parent=0 // loop_header_branch
    %14 = sbr.rel (%p12) target = $region8
  $region5: #{tpu_custom_call.1} parent=0 // loop_body
    %s16 = ssub.s32 %s11, 1
    %s17 = ssub.s32 %s11, 2
    %s27 = sadd.s32 1, %s20
    %p28 = scmp.ge.s32.totalorder %s27, 1
    %s29 = scalar_select %p28, 0, %s27
    %s30 = sadd.s32 1, %s19
    %s31 = scalar_select %p28, %s30, %s19
    %p32 = scmp.ge.s32.totalorder %s31, 1
    %s33 = scalar_select %p32, 0, %s31
    %s34 = sadd.s32 1, %s18
    %s35 = scalar_select %p32, %s34, %s18
    %p36 = scmp.ge.s32.totalorder %s35, 2
    %s37 = scalar_select %p36, 0, %s35
    %s38 = ssub.s32 %s18, %s37
    %p39 = scmp.eq.s32.totalorder %s38, 0
    %s41 = sadd.s32 %s40, 1
    %s42 = scalar_select %p39, %s40, %s41
    %p45 = pneg %p39
    %p46 = scmp.eq.s32.totalorder %s11, 1
    %p47 = por %p45, %p46
    %p48 = scmp.ne.s32.totalorder %s40, %s43
    %p49 = scmp.eq.s32.totalorder %s11, 0
    %p50 = por %p48, %p49
    %p51 = scmp.ne.s32.totalorder %s40, %s43
    %p52 = scmp.eq.s32.totalorder %s16, 1
    %p53 = por %p51, %p52
    %p54 = scmp.ne.s32.totalorder %s43, %s44
    %p55 = scmp.eq.s32.totalorder %s16, 0
    %p56 = por %p54, %p55
    %p57 = scmp.ne.s32.totalorder %s43, %s44
    %p58 = scmp.eq.s32.totalorder %s17, 1
    %p59 = por %p57, %p58
    %p61 = scmp.ne.s32.totalorder %s44, %s60
    %p62 = scmp.eq.s32.totalorder %s17, 0
    %p63 = por %p61, %p62
    %s65 = sadd.s32 %s64, 1
    %p68 = scmp.eq.s32.totalorder %s11, 1
    %p69 = scmp.ne.s32.totalorder %s64, %s66
    %p70 = scmp.eq.s32.totalorder %s11, 0
    %p71 = por %p69, %p70
    %p72 = scmp.ne.s32.totalorder %s64, %s66
    %p73 = scmp.eq.s32.totalorder %s16, 1
    %p74 = por %p72, %p73
    %p75 = scmp.ne.s32.totalorder %s66, %s67
    %p76 = scmp.eq.s32.totalorder %s16, 0
    %p77 = por %p75, %p76
    %p78 = scmp.ne.s32.totalorder %s66, %s67
    %p79 = scmp.eq.s32.totalorder %s17, 1
    %p80 = por %p78, %p79
    %p82 = scmp.ne.s32.totalorder %s67, %s81
    %p83 = scmp.eq.s32.totalorder %s17, 0
    %p84 = por %p82, %p83
    %s86 = sadd.s32 %s85, 1
    %p89 = scmp.eq.s32.totalorder %s11, 1
    %p90 = scmp.ne.s32.totalorder %s85, %s87
    %p91 = scmp.eq.s32.totalorder %s11, 0
    %p92 = por %p90, %p91
    %p93 = scmp.ne.s32.totalorder %s85, %s87
    %p94 = scmp.eq.s32.totalorder %s16, 1
    %p95 = por %p93, %p94
    %p96 = scmp.ne.s32.totalorder %s87, %s88
    %p97 = scmp.eq.s32.totalorder %s16, 0
    %p98 = por %p96, %p97
    %p99 = scmp.ne.s32.totalorder %s87, %s88
    %p100 = scmp.eq.s32.totalorder %s17, 1
    %p101 = por %p99, %p100
    %p103 = scmp.ne.s32.totalorder %s88, %s102
    %p104 = scmp.eq.s32.totalorder %s17, 0
    %p105 = por %p103, %p104
    %s106 = ssub.s32 %s20, %s29
    %p107 = scmp.eq.s32.totalorder %s106, 0
    %s109 = sadd.s32 %s108, 1
    %s110 = scalar_select %p107, %s108, %s109
    %p113 = pneg %p107
    %p114 = scmp.eq.s32.totalorder %s11, 1
    %p115 = por %p113, %p114
    %p116 = scmp.ne.s32.totalorder %s108, %s111
    %p117 = scmp.eq.s32.totalorder %s11, 0
    %p118 = por %p116, %p117
    %p119 = scmp.ne.s32.totalorder %s108, %s111
    %p120 = scmp.eq.s32.totalorder %s16, 1
    %p121 = por %p119, %p120
    %p122 = scmp.ne.s32.totalorder %s111, %s112
    %p123 = scmp.eq.s32.totalorder %s16, 0
    %p124 = por %p122, %p123
    %p125 = scmp.ne.s32.totalorder %s111, %s112
    %p126 = scmp.eq.s32.totalorder %s17, 1
    %p127 = por %p125, %p126
    %p129 = scmp.ne.s32.totalorder %s112, %s128
    %p130 = scmp.eq.s32.totalorder %s17, 0
    %p131 = por %p129, %p130
    %s132 = ssub.s32 %s20, %s29
    %p133 = scmp.eq.s32.totalorder %s132, 0
    %s135 = sadd.s32 %s134, 1
    %s136 = scalar_select %p133, %s134, %s135
    %p139 = pneg %p133
    %p140 = scmp.eq.s32.totalorder %s11, 1
    %p141 = por %p139, %p140
    %p142 = scmp.ne.s32.totalorder %s134, %s137
    %p143 = scmp.eq.s32.totalorder %s11, 0
    %p144 = por %p142, %p143
    %p145 = scmp.ne.s32.totalorder %s134, %s137
    %p146 = scmp.eq.s32.totalorder %s16, 1
    %p147 = por %p145, %p146
    %p148 = scmp.ne.s32.totalorder %s137, %s138
    %p149 = scmp.eq.s32.totalorder %s16, 0
    %p150 = por %p148, %p149
    %p151 = scmp.ne.s32.totalorder %s137, %s138
    %p152 = scmp.eq.s32.totalorder %s17, 1
    %p153 = por %p151, %p152
    %p155 = scmp.ne.s32.totalorder %s138, %s154
    %p156 = scmp.eq.s32.totalorder %s17, 0
    %p157 = por %p155, %p156
    %s158 = ssub.s32 %s18, %s37
    %s159 = ssub.s32 %s19, %s33
    %s160 = sor.u32 %s158, %s159
    %s161 = ssub.s32 %s20, %s29
    %s162 = sor.u32 %s160, %s161
    %p163 = scmp.eq.s32.totalorder %s162, 0
    %s165 = sadd.s32 %s164, 1
    %s166 = scalar_select %p163, %s164, %s165
    %p169 = pneg %p163
    %p170 = scmp.eq.s32.totalorder %s11, 1
    %p171 = por %p169, %p170
    %p172 = scmp.ne.s32.totalorder %s164, %s167
    %p173 = scmp.eq.s32.totalorder %s11, 0
    %p174 = por %p172, %p173
    %p175 = scmp.ne.s32.totalorder %s164, %s167
    %p176 = scmp.eq.s32.totalorder %s16, 1
    %p177 = por %p175, %p176
    %p178 = scmp.ne.s32.totalorder %s167, %s168
    %p179 = scmp.eq.s32.totalorder %s16, 0
    %p180 = por %p178, %p179
    %p181 = scmp.ne.s32.totalorder %s167, %s168
    %p182 = scmp.eq.s32.totalorder %s17, 1
    %p183 = por %p181, %p182
    %p185 = scmp.ne.s32.totalorder %s168, %s184
    %p186 = scmp.eq.s32.totalorder %s17, 0
    %p187 = por %p185, %p186
    %p188 = scmp.le.s32.totalorder 1, %s11
    %p189 = scmp.lt.s32.totalorder %s11, 3
    %p190 = pnand %p188, %p189
    %p191 = pneg %p190
    // Predicated region
    $region9: #{tpu_custom_call.1} parent=5 // pred_check
      _
    $region10: #{tpu_custom_call.1} parent=5 // pred_check_branch
      %193 = sbr.rel (%p190) target = $region12
    $region11: #{tpu_custom_call.1} parent=5 // pred_region
      %s194 = ssub.s32 %s11, 1
      // Predicated region
      $region13: #{tpu_custom_call.1} parent=11 // pred_check
        %p195 = pneg %p77
      $region14: #{tpu_custom_call.1} parent=11 // pred_check_branch
        %197 = sbr.rel (%p195) target = $region16
      $region15: #{tpu_custom_call.1} parent=11 // pred_region
        _
      $region16: #{tpu_custom_call.1} parent=11 // pred_fallthru
        _
      // Predicated region
      $region17: #{tpu_custom_call.1} parent=11 // pred_check
        %p198 = pneg %p98
      $region18: #{tpu_custom_call.1} parent=11 // pred_check_branch
        %200 = sbr.rel (%p198) target = $region20
      $region19: #{tpu_custom_call.1} parent=11 // pred_region
        _
      $region20: #{tpu_custom_call.1} parent=11 // pred_fallthru
        _
      // Predicated region
      $region21: #{tpu_custom_call.1} parent=11 // pred_check
        %p201 = pneg %p124
      $region22: #{tpu_custom_call.1} parent=11 // pred_check_branch
        %203 = sbr.rel (%p201) target = $region24
      $region23: #{tpu_custom_call.1} parent=11 // pred_region
        %p204 = scmp.lt.s32.totalorder %s23, 0
        %s205 = scalar_select %p204, %s23, 0
        %s206 = smul.addr %s205, 2
        %s207 = scalar_lea.vmem %s3, %s206
      $region24: #{tpu_custom_call.1} parent=11 // pred_fallthru
        _
      // Predicated region
      $region25: #{tpu_custom_call.1} parent=11 // pred_check
        %p208 = pneg %p150
      $region26: #{tpu_custom_call.1} parent=11 // pred_check_branch
        %210 = sbr.rel (%p208) target = $region28
      $region27: #{tpu_custom_call.1} parent=11 // pred_region
        %p211 = scmp.lt.s32.totalorder %s23, 0
        %s212 = scalar_select %p211, %s23, 0
        %s213 = scalar_lea.vmem %s4, %s212
      $region28: #{tpu_custom_call.1} parent=11 // pred_fallthru
        _
    $region12: #{tpu_custom_call.1} parent=5 // pred_fallthru
      _
    %p214 = scmp.lt.s32.totalorder %s11, 2
    // Predicated region
    $region29: #{tpu_custom_call.1} parent=5 // pred_check
      %p215 = pneg %p214
    $region30: #{tpu_custom_call.1} parent=5 // pred_check_branch
      %217 = sbr.rel (%p215) target = $region32
    $region31: #{tpu_custom_call.1} parent=5 // pred_region
      // Predicated region
      $region33: #{tpu_custom_call.1} parent=31 // pred_check
        %p218 = pneg %p50
      $region34: #{tpu_custom_call.1} parent=31 // pred_check_branch
        %220 = sbr.rel (%p218) target = $region36
      $region35: #{tpu_custom_call.1} parent=31 // pred_region
        %p221 = scmp.lt.s32.totalorder %s18, 1
        %s222 = scalar_select %p221, %s18, 1
        %s223 = smul.addr %s222, 54
        %s224 = smul.addr %s223, 4
        %s225 = scalar_lea.vmem %s0, %s224
      $region36: #{tpu_custom_call.1} parent=31 // pred_fallthru
        _
    $region32: #{tpu_custom_call.1} parent=5 // pred_fallthru
      _
    %p226 = scmp.le.s32.totalorder 1, %s11
    %p227 = scmp.lt.s32.totalorder %s11, 3
    %p228 = pnand %p226, %p227
    %p229 = pneg %p228
    // Predicated region
    $region37: #{tpu_custom_call.1} parent=5 // pred_check
      _
    $region38: #{tpu_custom_call.1} parent=5 // pred_check_branch
      %231 = sbr.rel (%p228) target = $region40
    $region39: #{tpu_custom_call.1} parent=5 // pred_region
      %s232 = ssub.s32 %s11, 1
      %p233 = scmp.lt.s32.totalorder %s21, 1
      %s234 = scalar_select %p233, %s21, 1
      %s235 = smul.addr %s234, 54
      %s236 = smul.addr %s235, 4
      %s237 = scalar_lea.vmem %s0, %s236
      %p238 = pneg %p56
      %p239 = pneg %p53
      %p240 = pneg %p77
      %p241 = pneg %p74
      %p242 = pneg %p98
      %p243 = pneg %p95
      %p244 = scmp.lt.s32.totalorder %s23, 0
      %s245 = scalar_select %p244, %s23, 0
      %s246 = smul.addr %s245, 2
      %s247 = scalar_lea.vmem %s3, %s246
      %p248 = pneg %p124
      %p249 = pneg %p121
      %p250 = scmp.lt.s32.totalorder %s23, 0
      %s251 = scalar_select %p250, %s23, 0
      %s252 = scalar_lea.vmem %s4, %s251
      %p253 = pneg %p150
      %p254 = pneg %p147
      %p255 = pneg %p180
      %p256 = pneg %p177
      %s257 = smul.u32 16, %s22
      %p258 = scmp.lt.s32.totalorder %s21, 1
      %s259 = scalar_select %p258, %s21, 1
      %p260 = scmp.lt.s32.totalorder %s257, 15
      %s261 = scalar_select %p260, %s257, 15
      %p262 = scmp.lt.s32.totalorder %s23, 0
      %s263 = scalar_select %p262, %s23, 0
      %s264 = smul.addr %s261, 2
      %s265 = sadd.s32 %s263, %s264
      %s266 = smul.addr %s259, 32
      %s267 = sadd.s32 %s265, %s266
      %s268 = smul.addr %s267, 4
      %s269 = scalar_lea.vmem %s5, %s268
      %p270 = scmp.lt.s32.totalorder %s21, 1
      %s271 = scalar_select %p270, %s21, 1
      %s272 = smul.addr %s271, 54
      %s273 = smul.addr %s272, 4
      %s274 = scalar_lea.vmem %s0, %s273
      %p275 = scmp.lt.s32.totalorder %s23, 0
      %s276 = scalar_select %p275, %s23, 0
      %s277 = smul.addr %s276, 2
      %s278 = scalar_lea.vmem %s3, %s277
      %p279 = scmp.lt.s32.totalorder %s23, 0
      %s280 = scalar_select %p279, %s23, 0
      %s281 = scalar_lea.vmem %s4, %s280
      %s282 = smul.u32 16, %s22
      %p283 = scmp.lt.s32.totalorder %s21, 1
      %s284 = scalar_select %p283, %s21, 1
      %p285 = scmp.lt.s32.totalorder %s282, 15
      %s286 = scalar_select %p285, %s282, 15
      %p287 = scmp.lt.s32.totalorder %s23, 0
      %s288 = scalar_select %p287, %s23, 0
      %s289 = smul.addr %s286, 2
      %s290 = sadd.s32 %s288, %s289
      %s291 = smul.addr %s284, 32
      %s292 = sadd.s32 %s290, %s291
      %s293 = smul.addr %s292, 4
      %s294 = scalar_lea.vmem %s5, %s293
      %s295 = smul.u32 16, %s22
      %p297 = scmp.eq.s32.totalorder %s23, 0
      // Predicated region
      $region41: #{tpu_custom_call.1} parent=39 // pred_check
        %p298 = pneg %p297
      $region42: #{tpu_custom_call.1} parent=39 // pred_check_branch
        %300 = sbr.rel (%p298) target = $region44
      $region43: #{tpu_custom_call.1} parent=39 // pred_region
        %s301 = smul.u32 %s22, 16
        %s302 = smul.u32 %s301, 3
        %s303 = smul.addr %s302, 4
        %s304 = scalar_lea.vmem %s274, %s303
        %v305 = vld [vmem:[%s304] sm:$0xf]
        %v306 = vld [vmem:[%s304 + $0x4] sm:$0xf]
        %v307 = vld [vmem:[%s304 + $0x8] sm:$0xf]
        %v308 = vld [vmem:[%s304 + $0xc] sm:$0xf]
        %v309 = vld [vmem:[%s304 + $0x10] sm:$0xf]
        %v310 = vld [vmem:[%s304 + $0x14] sm:$0xf]
        %v311 = vld [vmem:[%s304 + $0x18] sm:$0xf]
        %v312 = vld [vmem:[%s304 + $0x1c] sm:$0xf]
        %v313 = vld [vmem:[%s304 + $0x20] sm:$0xf]
        %v314 = vld [vmem:[%s304 + $0x24] sm:$0xf]
        %v315 = vld [vmem:[%s304 + $0x28] sm:$0xf]
        %v316 = vld [vmem:[%s304 + $0x2c] sm:$0xf]
        %v317 = vld [vmem:[%s304 + $0x30] sm:$0xf]
        %v318 = vld [vmem:[%s304 + $0x34] sm:$0xf]
        %v319 = vld [vmem:[%s304 + $0x38] sm:$0xf]
        %v320 = vld [vmem:[%s304 + $0x3c] sm:$0xf]
        %v321 = vld [vmem:[%s304 + $0x40] sm:$0xf]
        %v322 = vld [vmem:[%s304 + $0x44] sm:$0xf]
        %v323 = vld [vmem:[%s304 + $0x48] sm:$0xf]
        %v324 = vld [vmem:[%s304 + $0x4c] sm:$0xf]
        %v325 = vld [vmem:[%s304 + $0x50] sm:$0xf]
        %v326 = vld [vmem:[%s304 + $0x54] sm:$0xf]
        %v327 = vld [vmem:[%s304 + $0x58] sm:$0xf]
        %v328 = vld [vmem:[%s304 + $0x5c] sm:$0xf]
        %v329 = vld [vmem:[%s304 + $0x60] sm:$0xf]
        %v330 = vld [vmem:[%s304 + $0x64] sm:$0xf]
        %v331 = vld [vmem:[%s304 + $0x68] sm:$0xf]
        %v332 = vld [vmem:[%s304 + $0x6c] sm:$0xf]
        %v333 = vld [vmem:[%s304 + $0x70] sm:$0xf]
        %v334 = vld [vmem:[%s304 + $0x74] sm:$0xf]
        %v335 = vld [vmem:[%s304 + $0x78] sm:$0xf]
        %v336 = vld [vmem:[%s304 + $0x7c] sm:$0xf]
        %v337 = vld [vmem:[%s304 + $0x80] sm:$0xf]
        %v338 = vld [vmem:[%s304 + $0x84] sm:$0xf]
        %v339 = vld [vmem:[%s304 + $0x88] sm:$0xf]
        %v340 = vld [vmem:[%s304 + $0x8c] sm:$0xf]
        %v341 = vld [vmem:[%s304 + $0x90] sm:$0xf]
        %v342 = vld [vmem:[%s304 + $0x94] sm:$0xf]
        %v343 = vld [vmem:[%s304 + $0x98] sm:$0xf]
        %v344 = vld [vmem:[%s304 + $0x9c] sm:$0xf]
        %v345 = vld [vmem:[%s304 + $0xa0] sm:$0xf]
        %v346 = vld [vmem:[%s304 + $0xa4] sm:$0xf]
        %v347 = vld [vmem:[%s304 + $0xa8] sm:$0xf]
        %v348 = vld [vmem:[%s304 + $0xac] sm:$0xf]
        %v349 = vld [vmem:[%s304 + $0xb0] sm:$0xf]
        %v350 = vld [vmem:[%s304 + $0xb4] sm:$0xf]
        %v351 = vld [vmem:[%s304 + $0xb8] sm:$0xf]
        %v352 = vld [vmem:[%s304 + $0xbc] sm:$0xf]
        %v353 = vld [vmem:[%s304 + $0xc0] sm:$0xf]
        %v354 = vld [vmem:[%s304 + $0xc4] sm:$0xf]
        %v355 = vld [vmem:[%s304 + $0xc8] sm:$0xf]
        %v356 = vld [vmem:[%s304 + $0xcc] sm:$0xf]
        %v357 = vld [vmem:[%s304 + $0xd0] sm:$0xf]
        %v358 = vld [vmem:[%s304 + $0xd4] sm:$0xf]
        %v359 = vunpack.c.l.bf16 %v305
        %v360 = vunpack.c.l.bf16 %v306
        %v361 = vunpack.c.l.bf16 %v307
        %v362 = vunpack.c.l.bf16 %v308
        %v363 = vunpack.c.l.bf16 %v309
        %v364 = vunpack.c.l.bf16 %v310
        %v365 = vunpack.c.l.bf16 %v311
        %v366 = vunpack.c.l.bf16 %v312
        %v367 = vunpack.c.l.bf16 %v313
        %v368 = vunpack.c.l.bf16 %v314
        %v369 = vunpack.c.l.bf16 %v315
        %v370 = vunpack.c.l.bf16 %v316
        %v371 = vunpack.c.l.bf16 %v317
        %v372 = vunpack.c.l.bf16 %v318
        %v373 = vunpack.c.l.bf16 %v319
        %v374 = vunpack.c.l.bf16 %v320
        %v375 = vunpack.c.l.bf16 %v321
        %v376 = vunpack.c.l.bf16 %v322
        %v377 = vunpack.c.l.bf16 %v323
        %v378 = vunpack.c.l.bf16 %v324
        %v379 = vunpack.c.l.bf16 %v325
        %v380 = vunpack.c.l.bf16 %v326
        %v381 = vunpack.c.l.bf16 %v327
        %v382 = vunpack.c.l.bf16 %v328
        %v383 = vunpack.c.l.bf16 %v329
        %v384 = vunpack.c.l.bf16 %v330
        %v385 = vunpack.c.l.bf16 %v331
        %v386 = vunpack.c.l.bf16 %v332
        %v387 = vunpack.c.l.bf16 %v333
        %v388 = vunpack.c.l.bf16 %v334
        %v389 = vunpack.c.l.bf16 %v335
        %v390 = vunpack.c.l.bf16 %v336
        %v391 = vunpack.c.l.bf16 %v337
        %v392 = vunpack.c.l.bf16 %v338
        %v393 = vunpack.c.l.bf16 %v339
        %v394 = vunpack.c.l.bf16 %v340
        %v395 = vunpack.c.l.bf16 %v341
        %v396 = vunpack.c.l.bf16 %v342
        %v397 = vunpack.c.l.bf16 %v343
        %v398 = vunpack.c.l.bf16 %v344
        %v399 = vunpack.c.l.bf16 %v345
        %v400 = vunpack.c.l.bf16 %v346
        %v401 = vunpack.c.l.bf16 %v347
        %v402 = vunpack.c.l.bf16 %v348
        %v403 = vunpack.c.l.bf16 %v349
        %v404 = vunpack.c.l.bf16 %v350
        %v405 = vunpack.c.l.bf16 %v351
        %v406 = vunpack.c.l.bf16 %v352
        %v407 = vunpack.c.l.bf16 %v353
        %v408 = vunpack.c.l.bf16 %v354
        %v409 = vunpack.c.l.bf16 %v355
        %v410 = vunpack.c.l.bf16 %v356
        %v411 = vunpack.c.l.bf16 %v357
        %v412 = vunpack.c.l.bf16 %v358
        %v413 = vld [vmem:[%s1] sm:$0xff]
        %v414 = vld [vmem:[%s1 + $0x8] sm:$0x1]
        %v415 = vperm.slane %v413, 0
        %v416 = vmul.f32 %v359, %v415
        %v417 = vmul.f32 %v360, %v415
        %v418 = vmul.f32 %v362, %v415
        %v419 = vmul.f32 %v363, %v415
        %v420 = vmul.f32 %v365, %v415
        %v421 = vmul.f32 %v366, %v415
        %v422 = vmul.f32 %v368, %v415
        %v423 = vmul.f32 %v369, %v415
        %v424 = vmul.f32 %v371, %v415
        %v425 = vmul.f32 %v372, %v415
        %v426 = vmul.f32 %v374, %v415
        %v427 = vmul.f32 %v375, %v415
        %v428 = vmul.f32 %v377, %v415
        %v429 = vmul.f32 %v378, %v415
        %v430 = vmul.f32 %v380, %v415
        %v431 = vmul.f32 %v381, %v415
        %v432 = vmul.f32 %v383, %v415
        %v433 = vmul.f32 %v384, %v415
        %v434 = vmul.f32 %v386, %v415
        %v435 = vmul.f32 %v387, %v415
        %v436 = vmul.f32 %v389, %v415
        %v437 = vmul.f32 %v390, %v415
        %v438 = vmul.f32 %v392, %v415
        %v439 = vmul.f32 %v393, %v415
        %v440 = vmul.f32 %v395, %v415
        %v441 = vmul.f32 %v396, %v415
        %v442 = vmul.f32 %v398, %v415
        %v443 = vmul.f32 %v399, %v415
        %v444 = vmul.f32 %v401, %v415
        %v445 = vmul.f32 %v402, %v415
        %v446 = vmul.f32 %v404, %v415
        %v447 = vmul.f32 %v405, %v415
        %v448 = vperm.slane %v413, 3
        %v449 = vmul.f32 %v362, %v448
        %v450 = vmul.f32 %v363, %v448
        %v451 = vmul.f32 %v365, %v448
        %v452 = vmul.f32 %v366, %v448
        %v453 = vmul.f32 %v368, %v448
        %v454 = vmul.f32 %v369, %v448
        %v455 = vmul.f32 %v371, %v448
        %v456 = vmul.f32 %v372, %v448
        %v457 = vmul.f32 %v374, %v448
        %v458 = vmul.f32 %v375, %v448
        %v459 = vmul.f32 %v377, %v448
        %v460 = vmul.f32 %v378, %v448
        %v461 = vmul.f32 %v380, %v448
        %v462 = vmul.f32 %v381, %v448
        %v463 = vmul.f32 %v383, %v448
        %v464 = vmul.f32 %v384, %v448
        %v465 = vmul.f32 %v386, %v448
        %v466 = vmul.f32 %v387, %v448
        %v467 = vmul.f32 %v389, %v448
        %v468 = vmul.f32 %v390, %v448
        %v469 = vmul.f32 %v392, %v448
        %v470 = vmul.f32 %v393, %v448
        %v471 = vmul.f32 %v395, %v448
        %v472 = vmul.f32 %v396, %v448
        %v473 = vmul.f32 %v398, %v448
        %v474 = vmul.f32 %v399, %v448
        %v475 = vmul.f32 %v401, %v448
        %v476 = vmul.f32 %v402, %v448
        %v477 = vmul.f32 %v404, %v448
        %v478 = vmul.f32 %v405, %v448
        %v479 = vmul.f32 %v407, %v448
        %v480 = vmul.f32 %v408, %v448
        %v481 = vadd.f32 %v416, %v449
        %v482 = vadd.f32 %v417, %v450
        %v483 = vadd.f32 %v418, %v451
        %v484 = vadd.f32 %v419, %v452
        %v485 = vadd.f32 %v420, %v453
        %v486 = vadd.f32 %v421, %v454
        %v487 = vadd.f32 %v422, %v455
        %v488 = vadd.f32 %v423, %v456
        %v489 = vadd.f32 %v424, %v457
        %v490 = vadd.f32 %v425, %v458
        %v491 = vadd.f32 %v426, %v459
        %v492 = vadd.f32 %v427, %v460
        %v493 = vadd.f32 %v428, %v461
        %v494 = vadd.f32 %v429, %v462
        %v495 = vadd.f32 %v430, %v463
        %v496 = vadd.f32 %v431, %v464
        %v497 = vadd.f32 %v432, %v465
        %v498 = vadd.f32 %v433, %v466
        %v499 = vadd.f32 %v434, %v467
        %v500 = vadd.f32 %v435, %v468
        %v501 = vadd.f32 %v436, %v469
        %v502 = vadd.f32 %v437, %v470
        %v503 = vadd.f32 %v438, %v471
        %v504 = vadd.f32 %v439, %v472
        %v505 = vadd.f32 %v440, %v473
        %v506 = vadd.f32 %v441, %v474
        %v507 = vadd.f32 %v442, %v475
        %v508 = vadd.f32 %v443, %v476
        %v509 = vadd.f32 %v444, %v477
        %v510 = vadd.f32 %v445, %v478
        %v511 = vadd.f32 %v446, %v479
        %v512 = vadd.f32 %v447, %v480
        %v513 = vperm.slane %v413, 6
        %v514 = vmul.f32 %v365, %v513
        %v515 = vmul.f32 %v366, %v513
        %v516 = vmul.f32 %v368, %v513
        %v517 = vmul.f32 %v369, %v513
        %v518 = vmul.f32 %v371, %v513
        %v519 = vmul.f32 %v372, %v513
        %v520 = vmul.f32 %v374, %v513
        %v521 = vmul.f32 %v375, %v513
        %v522 = vmul.f32 %v377, %v513
        %v523 = vmul.f32 %v378, %v513
        %v524 = vmul.f32 %v380, %v513
        %v525 = vmul.f32 %v381, %v513
        %v526 = vmul.f32 %v383, %v513
        %v527 = vmul.f32 %v384, %v513
        %v528 = vmul.f32 %v386, %v513
        %v529 = vmul.f32 %v387, %v513
        %v530 = vmul.f32 %v389, %v513
        %v531 = vmul.f32 %v390, %v513
        %v532 = vmul.f32 %v392, %v513
        %v533 = vmul.f32 %v393, %v513
        %v534 = vmul.f32 %v395, %v513
        %v535 = vmul.f32 %v396, %v513
        %v536 = vmul.f32 %v398, %v513
        %v537 = vmul.f32 %v399, %v513
        %v538 = vmul.f32 %v401, %v513
        %v539 = vmul.f32 %v402, %v513
        %v540 = vmul.f32 %v404, %v513
        %v541 = vmul.f32 %v405, %v513
        %v542 = vmul.f32 %v407, %v513
        %v543 = vmul.f32 %v408, %v513
        %v544 = vmul.f32 %v410, %v513
        %v545 = vmul.f32 %v411, %v513
        %v546 = vadd.f32 %v481, %v514
        %v547 = vadd.f32 %v482, %v515
        %v548 = vadd.f32 %v483, %v516
        %v549 = vadd.f32 %v484, %v517
        %v550 = vadd.f32 %v485, %v518
        %v551 = vadd.f32 %v486, %v519
        %v552 = vadd.f32 %v487, %v520
        %v553 = vadd.f32 %v488, %v521
        %v554 = vadd.f32 %v489, %v522
        %v555 = vadd.f32 %v490, %v523
        %v556 = vadd.f32 %v491, %v524
        %v557 = vadd.f32 %v492, %v525
        %v558 = vadd.f32 %v493, %v526
        %v559 = vadd.f32 %v494, %v527
        %v560 = vadd.f32 %v495, %v528
        %v561 = vadd.f32 %v496, %v529
        %v562 = vadd.f32 %v497, %v530
        %v563 = vadd.f32 %v498, %v531
        %v564 = vadd.f32 %v499, %v532
        %v565 = vadd.f32 %v500, %v533
        %v566 = vadd.f32 %v501, %v534
        %v567 = vadd.f32 %v502, %v535
        %v568 = vadd.f32 %v503, %v536
        %v569 = vadd.f32 %v504, %v537
        %v570 = vadd.f32 %v505, %v538
        %v571 = vadd.f32 %v506, %v539
        %v572 = vadd.f32 %v507, %v540
        %v573 = vadd.f32 %v508, %v541
        %v574 = vadd.f32 %v509, %v542
        %v575 = vadd.f32 %v510, %v543
        %v576 = vadd.f32 %v511, %v544
        %v577 = vadd.f32 %v512, %v545
        %v578 = vperm.slane %v413, 1
        %v579 = vmul.f32 %v359, %v578
        %v580 = vmul.f32 %v360, %v578
        %v581 = vmul.f32 %v361, %v578
        %v582 = vmul.f32 %v362, %v578
        %v583 = vmul.f32 %v363, %v578
        %v584 = vmul.f32 %v364, %v578
        %v585 = vmul.f32 %v365, %v578
        %v586 = vmul.f32 %v366, %v578
        %v587 = vmul.f32 %v367, %v578
        %v588 = vmul.f32 %v368, %v578
        %v589 = vmul.f32 %v369, %v578
        %v590 = vmul.f32 %v370, %v578
        %v591 = vmul.f32 %v371, %v578
        %v592 = vmul.f32 %v372, %v578
        %v593 = vmul.f32 %v373, %v578
        %v594 = vmul.f32 %v374, %v578
        %v595 = vmul.f32 %v375, %v578
        %v596 = vmul.f32 %v376, %v578
        %v597 = vmul.f32 %v377, %v578
        %v598 = vmul.f32 %v378, %v578
        %v599 = vmul.f32 %v379, %v578
        %v600 = vmul.f32 %v380, %v578
        %v601 = vmul.f32 %v381, %v578
        %v602 = vmul.f32 %v382, %v578
        %v603 = vmul.f32 %v383, %v578
        %v604 = vmul.f32 %v384, %v578
        %v605 = vmul.f32 %v385, %v578
        %v606 = vmul.f32 %v386, %v578
        %v607 = vmul.f32 %v387, %v578
        %v608 = vmul.f32 %v388, %v578
        %v609 = vmul.f32 %v389, %v578
        %v610 = vmul.f32 %v390, %v578
        %v611 = vmul.f32 %v391, %v578
        %v612 = vmul.f32 %v392, %v578
        %v613 = vmul.f32 %v393, %v578
        %v614 = vmul.f32 %v394, %v578
        %v615 = vmul.f32 %v395, %v578
        %v616 = vmul.f32 %v396, %v578
        %v617 = vmul.f32 %v397, %v578
        %v618 = vmul.f32 %v398, %v578
        %v619 = vmul.f32 %v399, %v578
        %v620 = vmul.f32 %v400, %v578
        %v621 = vmul.f32 %v401, %v578
        %v622 = vmul.f32 %v402, %v578
        %v623 = vmul.f32 %v403, %v578
        %v624 = vmul.f32 %v404, %v578
        %v625 = vmul.f32 %v405, %v578
        %v626 = vmul.f32 %v406, %v578
        %vm675 = vcmask 1046528
        %v676 = vrot.slane %v579, 1
        %v677 = vrot.slane %v580, 1
        %v678 = vsel %vm675, %v676, %v677
        %v679 = vrot.slane %v581, 1
        %v680 = vsel %vm675, %v677, %v679
        %v681 = vrot.slane %v582, 1
        %v682 = vrot.slane %v583, 1
        %v683 = vsel %vm675, %v681, %v682
        %v684 = vrot.slane %v584, 1
        %v685 = vsel %vm675, %v682, %v684
        %v686 = vrot.slane %v585, 1
        %v687 = vrot.slane %v586, 1
        %v688 = vsel %vm675, %v686, %v687
        %v689 = vrot.slane %v587, 1
        %v690 = vsel %vm675, %v687, %v689
        %v691 = vrot.slane %v588, 1
        %v692 = vrot.slane %v589, 1
        %v693 = vsel %vm675, %v691, %v692
        %v694 = vrot.slane %v590, 1
        %v695 = vsel %vm675, %v692, %v694
        %v696 = vrot.slane %v591, 1
        %v697 = vrot.slane %v592, 1
        %v698 = vsel %vm675, %v696, %v697
        %v699 = vrot.slane %v593, 1
        %v700 = vsel %vm675, %v697, %v699
        %v701 = vrot.slane %v594, 1
        %v702 = vrot.slane %v595, 1
        %v703 = vsel %vm675, %v701, %v702
        %v704 = vrot.slane %v596, 1
        %v705 = vsel %vm675, %v702, %v704
        %v706 = vrot.slane %v597, 1
        %v707 = vrot.slane %v598, 1
        %v708 = vsel %vm675, %v706, %v707
        %v709 = vrot.slane %v599, 1
        %v710 = vsel %vm675, %v707, %v709
        %v711 = vrot.slane %v600, 1
        %v712 = vrot.slane %v601, 1
        %v713 = vsel %vm675, %v711, %v712
        %v714 = vrot.slane %v602, 1
        %v715 = vsel %vm675, %v712, %v714
        %v716 = vrot.slane %v603, 1
        %v717 = vrot.slane %v604, 1
        %v718 = vsel %vm675, %v716, %v717
        %v719 = vrot.slane %v605, 1
        %v720 = vsel %vm675, %v717, %v719
        %v721 = vrot.slane %v606, 1
        %v722 = vrot.slane %v607, 1
        %v723 = vsel %vm675, %v721, %v722
        %v724 = vrot.slane %v608, 1
        %v725 = vsel %vm675, %v722, %v724
        %v726 = vrot.slane %v609, 1
        %v727 = vrot.slane %v610, 1
        %v728 = vsel %vm675, %v726, %v727
        %v729 = vrot.slane %v611, 1
        %v730 = vsel %vm675, %v727, %v729
        %v731 = vrot.slane %v612, 1
        %v732 = vrot.slane %v613, 1
        %v733 = vsel %vm675, %v731, %v732
        %v734 = vrot.slane %v614, 1
        %v735 = vsel %vm675, %v732, %v734
        %v736 = vrot.slane %v615, 1
        %v737 = vrot.slane %v616, 1
        %v738 = vsel %vm675, %v736, %v737
        %v739 = vrot.slane %v617, 1
        %v740 = vsel %vm675, %v737, %v739
        %v741 = vrot.slane %v618, 1
        %v742 = vrot.slane %v619, 1
        %v743 = vsel %vm675, %v741, %v742
        %v744 = vrot.slane %v620, 1
        %v745 = vsel %vm675, %v742, %v744
        %v746 = vrot.slane %v621, 1
        %v747 = vrot.slane %v622, 1
        %v748 = vsel %vm675, %v746, %v747
        %v749 = vrot.slane %v623, 1
        %v750 = vsel %vm675, %v747, %v749
        %v751 = vrot.slane %v624, 1
        %v752 = vrot.slane %v625, 1
        %v753 = vsel %vm675, %v751, %v752
        %v754 = vrot.slane %v626, 1
        %v755 = vsel %vm675, %v752, %v754
        %v788 = vadd.f32 %v546, %v678
        %v789 = vadd.f32 %v547, %v680
        %v790 = vadd.f32 %v548, %v683
        %v791 = vadd.f32 %v549, %v685
        %v792 = vadd.f32 %v550, %v688
        %v793 = vadd.f32 %v551, %v690
        %v794 = vadd.f32 %v552, %v693
        %v795 = vadd.f32 %v553, %v695
        %v796 = vadd.f32 %v554, %v698
        %v797 = vadd.f32 %v555, %v700
        %v798 = vadd.f32 %v556, %v703
        %v799 = vadd.f32 %v557, %v705
        %v800 = vadd.f32 %v558, %v708
        %v801 = vadd.f32 %v559, %v710
        %v802 = vadd.f32 %v560, %v713
        %v803 = vadd.f32 %v561, %v715
        %v804 = vadd.f32 %v562, %v718
        %v805 = vadd.f32 %v563, %v720
        %v806 = vadd.f32 %v564, %v723
        %v807 = vadd.f32 %v565, %v725
        %v808 = vadd.f32 %v566, %v728
        %v809 = vadd.f32 %v567, %v730
        %v810 = vadd.f32 %v568, %v733
        %v811 = vadd.f32 %v569, %v735
        %v812 = vadd.f32 %v570, %v738
        %v813 = vadd.f32 %v571, %v740
        %v814 = vadd.f32 %v572, %v743
        %v815 = vadd.f32 %v573, %v745
        %v816 = vadd.f32 %v574, %v748
        %v817 = vadd.f32 %v575, %v750
        %v818 = vadd.f32 %v576, %v753
        %v819 = vadd.f32 %v577, %v755
        %v820 = vperm.slane %v413, 4
        %v821 = vmul.f32 %v362, %v820
        %v822 = vmul.f32 %v363, %v820
        %v823 = vmul.f32 %v364, %v820
        %v824 = vmul.f32 %v365, %v820
        %v825 = vmul.f32 %v366, %v820
        %v826 = vmul.f32 %v367, %v820
        %v827 = vmul.f32 %v368, %v820
        %v828 = vmul.f32 %v369, %v820
        %v829 = vmul.f32 %v370, %v820
        %v830 = vmul.f32 %v371, %v820
        %v831 = vmul.f32 %v372, %v820
        %v832 = vmul.f32 %v373, %v820
        %v833 = vmul.f32 %v374, %v820
        %v834 = vmul.f32 %v375, %v820
        %v835 = vmul.f32 %v376, %v820
        %v836 = vmul.f32 %v377, %v820
        %v837 = vmul.f32 %v378, %v820
        %v838 = vmul.f32 %v379, %v820
        %v839 = vmul.f32 %v380, %v820
        %v840 = vmul.f32 %v381, %v820
        %v841 = vmul.f32 %v382, %v820
        %v842 = vmul.f32 %v383, %v820
        %v843 = vmul.f32 %v384, %v820
        %v844 = vmul.f32 %v385, %v820
        %v845 = vmul.f32 %v386, %v820
        %v846 = vmul.f32 %v387, %v820
        %v847 = vmul.f32 %v388, %v820
        %v848 = vmul.f32 %v389, %v820
        %v849 = vmul.f32 %v390, %v820
        %v850 = vmul.f32 %v391, %v820
        %v851 = vmul.f32 %v392, %v820
        %v852 = vmul.f32 %v393, %v820
        %v853 = vmul.f32 %v394, %v820
        %v854 = vmul.f32 %v395, %v820
        %v855 = vmul.f32 %v396, %v820
        %v856 = vmul.f32 %v397, %v820
        %v857 = vmul.f32 %v398, %v820
        %v858 = vmul.f32 %v399, %v820
        %v859 = vmul.f32 %v400, %v820
        %v860 = vmul.f32 %v401, %v820
        %v861 = vmul.f32 %v402, %v820
        %v862 = vmul.f32 %v403, %v820
        %v863 = vmul.f32 %v404, %v820
        %v864 = vmul.f32 %v405, %v820
        %v865 = vmul.f32 %v406, %v820
        %v866 = vmul.f32 %v407, %v820
        %v867 = vmul.f32 %v408, %v820
        %v868 = vmul.f32 %v409, %v820
        %v917 = vrot.slane %v821, 1
        %v918 = vrot.slane %v822, 1
        %v919 = vsel %vm675, %v917, %v918
        %v920 = vrot.slane %v823, 1
        %v921 = vsel %vm675, %v918, %v920
        %v922 = vrot.slane %v824, 1
        %v923 = vrot.slane %v825, 1
        %v924 = vsel %vm675, %v922, %v923
        %v925 = vrot.slane %v826, 1
        %v926 = vsel %vm675, %v923, %v925
        %v927 = vrot.slane %v827, 1
        %v928 = vrot.slane %v828, 1
        %v929 = vsel %vm675, %v927, %v928
        %v930 = vrot.slane %v829, 1
        %v931 = vsel %vm675, %v928, %v930
        %v932 = vrot.slane %v830, 1
        %v933 = vrot.slane %v831, 1
        %v934 = vsel %vm675, %v932, %v933
        %v935 = vrot.slane %v832, 1
        %v936 = vsel %vm675, %v933, %v935
        %v937 = vrot.slane %v833, 1
        %v938 = vrot.slane %v834, 1
        %v939 = vsel %vm675, %v937, %v938
        %v940 = vrot.slane %v835, 1
        %v941 = vsel %vm675, %v938, %v940
        %v942 = vrot.slane %v836, 1
        %v943 = vrot.slane %v837, 1
        %v944 = vsel %vm675, %v942, %v943
        %v945 = vrot.slane %v838, 1
        %v946 = vsel %vm675, %v943, %v945
        %v947 = vrot.slane %v839, 1
        %v948 = vrot.slane %v840, 1
        %v949 = vsel %vm675, %v947, %v948
        %v950 = vrot.slane %v841, 1
        %v951 = vsel %vm675, %v948, %v950
        %v952 = vrot.slane %v842, 1
        %v953 = vrot.slane %v843, 1
        %v954 = vsel %vm675, %v952, %v953
        %v955 = vrot.slane %v844, 1
        %v956 = vsel %vm675, %v953, %v955
        %v957 = vrot.slane %v845, 1
        %v958 = vrot.slane %v846, 1
        %v959 = vsel %vm675, %v957, %v958
        %v960 = vrot.slane %v847, 1
        %v961 = vsel %vm675, %v958, %v960
        %v962 = vrot.slane %v848, 1
        %v963 = vrot.slane %v849, 1
        %v964 = vsel %vm675, %v962, %v963
        %v965 = vrot.slane %v850, 1
        %v966 = vsel %vm675, %v963, %v965
        %v967 = vrot.slane %v851, 1
        %v968 = vrot.slane %v852, 1
        %v969 = vsel %vm675, %v967, %v968
        %v970 = vrot.slane %v853, 1
        %v971 = vsel %vm675, %v968, %v970
        %v972 = vrot.slane %v854, 1
        %v973 = vrot.slane %v855, 1
        %v974 = vsel %vm675, %v972, %v973
        %v975 = vrot.slane %v856, 1
        %v976 = vsel %vm675, %v973, %v975
        %v977 = vrot.slane %v857, 1
        %v978 = vrot.slane %v858, 1
        %v979 = vsel %vm675, %v977, %v978
        %v980 = vrot.slane %v859, 1
        %v981 = vsel %vm675, %v978, %v980
        %v982 = vrot.slane %v860, 1
        %v983 = vrot.slane %v861, 1
        %v984 = vsel %vm675, %v982, %v983
        %v985 = vrot.slane %v862, 1
        %v986 = vsel %vm675, %v983, %v985
        %v987 = vrot.slane %v863, 1
        %v988 = vrot.slane %v864, 1
        %v989 = vsel %vm675, %v987, %v988
        %v990 = vrot.slane %v865, 1
        %v991 = vsel %vm675, %v988, %v990
        %v992 = vrot.slane %v866, 1
        %v993 = vrot.slane %v867, 1
        %v994 = vsel %vm675, %v992, %v993
        %v995 = vrot.slane %v868, 1
        %v996 = vsel %vm675, %v993, %v995
        %v1029 = vadd.f32 %v788, %v919
        %v1030 = vadd.f32 %v789, %v921
        %v1031 = vadd.f32 %v790, %v924
        %v1032 = vadd.f32 %v791, %v926
        %v1033 = vadd.f32 %v792, %v929
        %v1034 = vadd.f32 %v793, %v931
        %v1035 = vadd.f32 %v794, %v934
        %v1036 = vadd.f32 %v795, %v936
        %v1037 = vadd.f32 %v796, %v939
        %v1038 = vadd.f32 %v797, %v941
        %v1039 = vadd.f32 %v798, %v944
        %v1040 = vadd.f32 %v799, %v946
        %v1041 = vadd.f32 %v800, %v949
        %v1042 = vadd.f32 %v801, %v951
        %v1043 = vadd.f32 %v802, %v954
        %v1044 = vadd.f32 %v803, %v956
        %v1045 = vadd.f32 %v804, %v959
        %v1046 = vadd.f32 %v805, %v961
        %v1047 = vadd.f32 %v806, %v964
        %v1048 = vadd.f32 %v807, %v966
        %v1049 = vadd.f32 %v808, %v969
        %v1050 = vadd.f32 %v809, %v971
        %v1051 = vadd.f32 %v810, %v974
        %v1052 = vadd.f32 %v811, %v976
        %v1053 = vadd.f32 %v812, %v979
        %v1054 = vadd.f32 %v813, %v981
        %v1055 = vadd.f32 %v814, %v984
        %v1056 = vadd.f32 %v815, %v986
        %v1057 = vadd.f32 %v816, %v989
        %v1058 = vadd.f32 %v817, %v991
        %v1059 = vadd.f32 %v818, %v994
        %v1060 = vadd.f32 %v819, %v996
        %v1061 = vperm.slane %v413, 7
        %v1062 = vmul.f32 %v365, %v1061
        %v1063 = vmul.f32 %v366, %v1061
        %v1064 = vmul.f32 %v367, %v1061
        %v1065 = vmul.f32 %v368, %v1061
        %v1066 = vmul.f32 %v369, %v1061
        %v1067 = vmul.f32 %v370, %v1061
        %v1068 = vmul.f32 %v371, %v1061
        %v1069 = vmul.f32 %v372, %v1061
        %v1070 = vmul.f32 %v373, %v1061
        %v1071 = vmul.f32 %v374, %v1061
        %v1072 = vmul.f32 %v375, %v1061
        %v1073 = vmul.f32 %v376, %v1061
        %v1074 = vmul.f32 %v377, %v1061
        %v1075 = vmul.f32 %v378, %v1061
        %v1076 = vmul.f32 %v379, %v1061
        %v1077 = vmul.f32 %v380, %v1061
        %v1078 = vmul.f32 %v381, %v1061
        %v1079 = vmul.f32 %v382, %v1061
        %v1080 = vmul.f32 %v383, %v1061
        %v1081 = vmul.f32 %v384, %v1061
        %v1082 = vmul.f32 %v385, %v1061
        %v1083 = vmul.f32 %v386, %v1061
        %v1084 = vmul.f32 %v387, %v1061
        %v1085 = vmul.f32 %v388, %v1061
        %v1086 = vmul.f32 %v389, %v1061
        %v1087 = vmul.f32 %v390, %v1061
        %v1088 = vmul.f32 %v391, %v1061
        %v1089 = vmul.f32 %v392, %v1061
        %v1090 = vmul.f32 %v393, %v1061
        %v1091 = vmul.f32 %v394, %v1061
        %v1092 = vmul.f32 %v395, %v1061
        %v1093 = vmul.f32 %v396, %v1061
        %v1094 = vmul.f32 %v397, %v1061
        %v1095 = vmul.f32 %v398, %v1061
        %v1096 = vmul.f32 %v399, %v1061
        %v1097 = vmul.f32 %v400, %v1061
        %v1098 = vmul.f32 %v401, %v1061
        %v1099 = vmul.f32 %v402, %v1061
        %v1100 = vmul.f32 %v403, %v1061
        %v1101 = vmul.f32 %v404, %v1061
        %v1102 = vmul.f32 %v405, %v1061
        %v1103 = vmul.f32 %v406, %v1061
        %v1104 = vmul.f32 %v407, %v1061
        %v1105 = vmul.f32 %v408, %v1061
        %v1106 = vmul.f32 %v409, %v1061
        %v1107 = vmul.f32 %v410, %v1061
        %v1108 = vmul.f32 %v411, %v1061
        %v1109 = vmul.f32 %v412, %v1061
        %v1158 = vrot.slane %v1062, 1
        %v1159 = vrot.slane %v1063, 1
        %v1160 = vsel %vm675, %v1158, %v1159
        %v1161 = vrot.slane %v1064, 1
        %v1162 = vsel %vm675, %v1159, %v1161
        %v1163 = vrot.slane %v1065, 1
        %v1164 = vrot.slane %v1066, 1
        %v1165 = vsel %vm675, %v1163, %v1164
        %v1166 = vrot.slane %v1067, 1
        %v1167 = vsel %vm675, %v1164, %v1166
        %v1168 = vrot.slane %v1068, 1
        %v1169 = vrot.slane %v1069, 1
        %v1170 = vsel %vm675, %v1168, %v1169
        %v1171 = vrot.slane %v1070, 1
        %v1172 = vsel %vm675, %v1169, %v1171
        %v1173 = vrot.slane %v1071, 1
        %v1174 = vrot.slane %v1072, 1
        %v1175 = vsel %vm675, %v1173, %v1174
        %v1176 = vrot.slane %v1073, 1
        %v1177 = vsel %vm675, %v1174, %v1176
        %v1178 = vrot.slane %v1074, 1
        %v1179 = vrot.slane %v1075, 1
        %v1180 = vsel %vm675, %v1178, %v1179
        %v1181 = vrot.slane %v1076, 1
        %v1182 = vsel %vm675, %v1179, %v1181
        %v1183 = vrot.slane %v1077, 1
        %v1184 = vrot.slane %v1078, 1
        %v1185 = vsel %vm675, %v1183, %v1184
        %v1186 = vrot.slane %v1079, 1
        %v1187 = vsel %vm675, %v1184, %v1186
        %v1188 = vrot.slane %v1080, 1
        %v1189 = vrot.slane %v1081, 1
        %v1190 = vsel %vm675, %v1188, %v1189
        %v1191 = vrot.slane %v1082, 1
        %v1192 = vsel %vm675, %v1189, %v1191
        %v1193 = vrot.slane %v1083, 1
        %v1194 = vrot.slane %v1084, 1
        %v1195 = vsel %vm675, %v1193, %v1194
        %v1196 = vrot.slane %v1085, 1
        %v1197 = vsel %vm675, %v1194, %v1196
        %v1198 = vrot.slane %v1086, 1
        %v1199 = vrot.slane %v1087, 1
        %v1200 = vsel %vm675, %v1198, %v1199
        %v1201 = vrot.slane %v1088, 1
        %v1202 = vsel %vm675, %v1199, %v1201
        %v1203 = vrot.slane %v1089, 1
        %v1204 = vrot.slane %v1090, 1
        %v1205 = vsel %vm675, %v1203, %v1204
        %v1206 = vrot.slane %v1091, 1
        %v1207 = vsel %vm675, %v1204, %v1206
        %v1208 = vrot.slane %v1092, 1
        %v1209 = vrot.slane %v1093, 1
        %v1210 = vsel %vm675, %v1208, %v1209
        %v1211 = vrot.slane %v1094, 1
        %v1212 = vsel %vm675, %v1209, %v1211
        %v1213 = vrot.slane %v1095, 1
        %v1214 = vrot.slane %v1096, 1
        %v1215 = vsel %vm675, %v1213, %v1214
        %v1216 = vrot.slane %v1097, 1
        %v1217 = vsel %vm675, %v1214, %v1216
        %v1218 = vrot.slane %v1098, 1
        %v1219 = vrot.slane %v1099, 1
        %v1220 = vsel %vm675, %v1218, %v1219
        %v1221 = vrot.slane %v1100, 1
        %v1222 = vsel %vm675, %v1219, %v1221
        %v1223 = vrot.slane %v1101, 1
        %v1224 = vrot.slane %v1102, 1
        %v1225 = vsel %vm675, %v1223, %v1224
        %v1226 = vrot.slane %v1103, 1
        %v1227 = vsel %vm675, %v1224, %v1226
        %v1228 = vrot.slane %v1104, 1
        %v1229 = vrot.slane %v1105, 1
        %v1230 = vsel %vm675, %v1228, %v1229
        %v1231 = vrot.slane %v1106, 1
        %v1232 = vsel %vm675, %v1229, %v1231
        %v1233 = vrot.slane %v1107, 1
        %v1234 = vrot.slane %v1108, 1
        %v1235 = vsel %vm675, %v1233, %v1234
        %v1236 = vrot.slane %v1109, 1
        %v1237 = vsel %vm675, %v1234, %v1236
        %v1270 = vadd.f32 %v1029, %v1160
        %v1271 = vadd.f32 %v1030, %v1162
        %v1272 = vadd.f32 %v1031, %v1165
        %v1273 = vadd.f32 %v1032, %v1167
        %v1274 = vadd.f32 %v1033, %v1170
        %v1275 = vadd.f32 %v1034, %v1172
        %v1276 = vadd.f32 %v1035, %v1175
        %v1277 = vadd.f32 %v1036, %v1177
        %v1278 = vadd.f32 %v1037, %v1180
        %v1279 = vadd.f32 %v1038, %v1182
        %v1280 = vadd.f32 %v1039, %v1185
        %v1281 = vadd.f32 %v1040, %v1187
        %v1282 = vadd.f32 %v1041, %v1190
        %v1283 = vadd.f32 %v1042, %v1192
        %v1284 = vadd.f32 %v1043, %v1195
        %v1285 = vadd.f32 %v1044, %v1197
        %v1286 = vadd.f32 %v1045, %v1200
        %v1287 = vadd.f32 %v1046, %v1202
        %v1288 = vadd.f32 %v1047, %v1205
        %v1289 = vadd.f32 %v1048, %v1207
        %v1290 = vadd.f32 %v1049, %v1210
        %v1291 = vadd.f32 %v1050, %v1212
        %v1292 = vadd.f32 %v1051, %v1215
        %v1293 = vadd.f32 %v1052, %v1217
        %v1294 = vadd.f32 %v1053, %v1220
        %v1295 = vadd.f32 %v1054, %v1222
        %v1296 = vadd.f32 %v1055, %v1225
        %v1297 = vadd.f32 %v1056, %v1227
        %v1298 = vadd.f32 %v1057, %v1230
        %v1299 = vadd.f32 %v1058, %v1232
        %v1300 = vadd.f32 %v1059, %v1235
        %v1301 = vadd.f32 %v1060, %v1237
        %v1302 = vperm.slane %v413, 2
        %v1303 = vmul.f32 %v359, %v1302
        %v1304 = vmul.f32 %v360, %v1302
        %v1305 = vmul.f32 %v361, %v1302
        %v1306 = vmul.f32 %v362, %v1302
        %v1307 = vmul.f32 %v363, %v1302
        %v1308 = vmul.f32 %v364, %v1302
        %v1309 = vmul.f32 %v365, %v1302
        %v1310 = vmul.f32 %v366, %v1302
        %v1311 = vmul.f32 %v367, %v1302
        %v1312 = vmul.f32 %v368, %v1302
        %v1313 = vmul.f32 %v369, %v1302
        %v1314 = vmul.f32 %v370, %v1302
        %v1315 = vmul.f32 %v371, %v1302
        %v1316 = vmul.f32 %v372, %v1302
        %v1317 = vmul.f32 %v373, %v1302
        %v1318 = vmul.f32 %v374, %v1302
        %v1319 = vmul.f32 %v375, %v1302
        %v1320 = vmul.f32 %v376, %v1302
        %v1321 = vmul.f32 %v377, %v1302
        %v1322 = vmul.f32 %v378, %v1302
        %v1323 = vmul.f32 %v379, %v1302
        %v1324 = vmul.f32 %v380, %v1302
        %v1325 = vmul.f32 %v381, %v1302
        %v1326 = vmul.f32 %v382, %v1302
        %v1327 = vmul.f32 %v383, %v1302
        %v1328 = vmul.f32 %v384, %v1302
        %v1329 = vmul.f32 %v385, %v1302
        %v1330 = vmul.f32 %v386, %v1302
        %v1331 = vmul.f32 %v387, %v1302
        %v1332 = vmul.f32 %v388, %v1302
        %v1333 = vmul.f32 %v389, %v1302
        %v1334 = vmul.f32 %v390, %v1302
        %v1335 = vmul.f32 %v391, %v1302
        %v1336 = vmul.f32 %v392, %v1302
        %v1337 = vmul.f32 %v393, %v1302
        %v1338 = vmul.f32 %v394, %v1302
        %v1339 = vmul.f32 %v395, %v1302
        %v1340 = vmul.f32 %v396, %v1302
        %v1341 = vmul.f32 %v397, %v1302
        %v1342 = vmul.f32 %v398, %v1302
        %v1343 = vmul.f32 %v399, %v1302
        %v1344 = vmul.f32 %v400, %v1302
        %v1345 = vmul.f32 %v401, %v1302
        %v1346 = vmul.f32 %v402, %v1302
        %v1347 = vmul.f32 %v403, %v1302
        %v1348 = vmul.f32 %v404, %v1302
        %v1349 = vmul.f32 %v405, %v1302
        %v1350 = vmul.f32 %v406, %v1302
        %vm1399 = vcmask 1045504
        %v1400 = vrot.slane %v1303, 2
        %v1401 = vrot.slane %v1304, 2
        %v1402 = vsel %vm1399, %v1400, %v1401
        %v1403 = vrot.slane %v1305, 2
        %v1404 = vsel %vm1399, %v1401, %v1403
        %v1405 = vrot.slane %v1306, 2
        %v1406 = vrot.slane %v1307, 2
        %v1407 = vsel %vm1399, %v1405, %v1406
        %v1408 = vrot.slane %v1308, 2
        %v1409 = vsel %vm1399, %v1406, %v1408
        %v1410 = vrot.slane %v1309, 2
        %v1411 = vrot.slane %v1310, 2
        %v1412 = vsel %vm1399, %v1410, %v1411
        %v1413 = vrot.slane %v1311, 2
        %v1414 = vsel %vm1399, %v1411, %v1413
        %v1415 = vrot.slane %v1312, 2
        %v1416 = vrot.slane %v1313, 2
        %v1417 = vsel %vm1399, %v1415, %v1416
        %v1418 = vrot.slane %v1314, 2
        %v1419 = vsel %vm1399, %v1416, %v1418
        %v1420 = vrot.slane %v1315, 2
        %v1421 = vrot.slane %v1316, 2
        %v1422 = vsel %vm1399, %v1420, %v1421
        %v1423 = vrot.slane %v1317, 2
        %v1424 = vsel %vm1399, %v1421, %v1423
        %v1425 = vrot.slane %v1318, 2
        %v1426 = vrot.slane %v1319, 2
        %v1427 = vsel %vm1399, %v1425, %v1426
        %v1428 = vrot.slane %v1320, 2
        %v1429 = vsel %vm1399, %v1426, %v1428
        %v1430 = vrot.slane %v1321, 2
        %v1431 = vrot.slane %v1322, 2
        %v1432 = vsel %vm1399, %v1430, %v1431
        %v1433 = vrot.slane %v1323, 2
        %v1434 = vsel %vm1399, %v1431, %v1433
        %v1435 = vrot.slane %v1324, 2
        %v1436 = vrot.slane %v1325, 2
        %v1437 = vsel %vm1399, %v1435, %v1436
        %v1438 = vrot.slane %v1326, 2
        %v1439 = vsel %vm1399, %v1436, %v1438
        %v1440 = vrot.slane %v1327, 2
        %v1441 = vrot.slane %v1328, 2
        %v1442 = vsel %vm1399, %v1440, %v1441
        %v1443 = vrot.slane %v1329, 2
        %v1444 = vsel %vm1399, %v1441, %v1443
        %v1445 = vrot.slane %v1330, 2
        %v1446 = vrot.slane %v1331, 2
        %v1447 = vsel %vm1399, %v1445, %v1446
        %v1448 = vrot.slane %v1332, 2
        %v1449 = vsel %vm1399, %v1446, %v1448
        %v1450 = vrot.slane %v1333, 2
        %v1451 = vrot.slane %v1334, 2
        %v1452 = vsel %vm1399, %v1450, %v1451
        %v1453 = vrot.slane %v1335, 2
        %v1454 = vsel %vm1399, %v1451, %v1453
        %v1455 = vrot.slane %v1336, 2
        %v1456 = vrot.slane %v1337, 2
        %v1457 = vsel %vm1399, %v1455, %v1456
        %v1458 = vrot.slane %v1338, 2
        %v1459 = vsel %vm1399, %v1456, %v1458
        %v1460 = vrot.slane %v1339, 2
        %v1461 = vrot.slane %v1340, 2
        %v1462 = vsel %vm1399, %v1460, %v1461
        %v1463 = vrot.slane %v1341, 2
        %v1464 = vsel %vm1399, %v1461, %v1463
        %v1465 = vrot.slane %v1342, 2
        %v1466 = vrot.slane %v1343, 2
        %v1467 = vsel %vm1399, %v1465, %v1466
        %v1468 = vrot.slane %v1344, 2
        %v1469 = vsel %vm1399, %v1466, %v1468
        %v1470 = vrot.slane %v1345, 2
        %v1471 = vrot.slane %v1346, 2
        %v1472 = vsel %vm1399, %v1470, %v1471
        %v1473 = vrot.slane %v1347, 2
        %v1474 = vsel %vm1399, %v1471, %v1473
        %v1475 = vrot.slane %v1348, 2
        %v1476 = vrot.slane %v1349, 2
        %v1477 = vsel %vm1399, %v1475, %v1476
        %v1478 = vrot.slane %v1350, 2
        %v1479 = vsel %vm1399, %v1476, %v1478
        %v1512 = vadd.f32 %v1270, %v1402
        %v1513 = vadd.f32 %v1271, %v1404
        %v1514 = vadd.f32 %v1272, %v1407
        %v1515 = vadd.f32 %v1273, %v1409
        %v1516 = vadd.f32 %v1274, %v1412
        %v1517 = vadd.f32 %v1275, %v1414
        %v1518 = vadd.f32 %v1276, %v1417
        %v1519 = vadd.f32 %v1277, %v1419
        %v1520 = vadd.f32 %v1278, %v1422
        %v1521 = vadd.f32 %v1279, %v1424
        %v1522 = vadd.f32 %v1280, %v1427
        %v1523 = vadd.f32 %v1281, %v1429
        %v1524 = vadd.f32 %v1282, %v1432
        %v1525 = vadd.f32 %v1283, %v1434
        %v1526 = vadd.f32 %v1284, %v1437
        %v1527 = vadd.f32 %v1285, %v1439
        %v1528 = vadd.f32 %v1286, %v1442
        %v1529 = vadd.f32 %v1287, %v1444
        %v1530 = vadd.f32 %v1288, %v1447
        %v1531 = vadd.f32 %v1289, %v1449
        %v1532 = vadd.f32 %v1290, %v1452
        %v1533 = vadd.f32 %v1291, %v1454
        %v1534 = vadd.f32 %v1292, %v1457
        %v1535 = vadd.f32 %v1293, %v1459
        %v1536 = vadd.f32 %v1294, %v1462
        %v1537 = vadd.f32 %v1295, %v1464
        %v1538 = vadd.f32 %v1296, %v1467
        %v1539 = vadd.f32 %v1297, %v1469
        %v1540 = vadd.f32 %v1298, %v1472
        %v1541 = vadd.f32 %v1299, %v1474
        %v1542 = vadd.f32 %v1300, %v1477
        %v1543 = vadd.f32 %v1301, %v1479
        %v1544 = vperm.slane %v413, 5
        %v1545 = vmul.f32 %v362, %v1544
        %v1546 = vmul.f32 %v363, %v1544
        %v1547 = vmul.f32 %v364, %v1544
        %v1548 = vmul.f32 %v365, %v1544
        %v1549 = vmul.f32 %v366, %v1544
        %v1550 = vmul.f32 %v367, %v1544
        %v1551 = vmul.f32 %v368, %v1544
        %v1552 = vmul.f32 %v369, %v1544
        %v1553 = vmul.f32 %v370, %v1544
        %v1554 = vmul.f32 %v371, %v1544
        %v1555 = vmul.f32 %v372, %v1544
        %v1556 = vmul.f32 %v373, %v1544
        %v1557 = vmul.f32 %v374, %v1544
        %v1558 = vmul.f32 %v375, %v1544
        %v1559 = vmul.f32 %v376, %v1544
        %v1560 = vmul.f32 %v377, %v1544
        %v1561 = vmul.f32 %v378, %v1544
        %v1562 = vmul.f32 %v379, %v1544
        %v1563 = vmul.f32 %v380, %v1544
        %v1564 = vmul.f32 %v381, %v1544
        %v1565 = vmul.f32 %v382, %v1544
        %v1566 = vmul.f32 %v383, %v1544
        %v1567 = vmul.f32 %v384, %v1544
        %v1568 = vmul.f32 %v385, %v1544
        %v1569 = vmul.f32 %v386, %v1544
        %v1570 = vmul.f32 %v387, %v1544
        %v1571 = vmul.f32 %v388, %v1544
        %v1572 = vmul.f32 %v389, %v1544
        %v1573 = vmul.f32 %v390, %v1544
        %v1574 = vmul.f32 %v391, %v1544
        %v1575 = vmul.f32 %v392, %v1544
        %v1576 = vmul.f32 %v393, %v1544
        %v1577 = vmul.f32 %v394, %v1544
        %v1578 = vmul.f32 %v395, %v1544
        %v1579 = vmul.f32 %v396, %v1544
        %v1580 = vmul.f32 %v397, %v1544
        %v1581 = vmul.f32 %v398, %v1544
        %v1582 = vmul.f32 %v399, %v1544
        %v1583 = vmul.f32 %v400, %v1544
        %v1584 = vmul.f32 %v401, %v1544
        %v1585 = vmul.f32 %v402, %v1544
        %v1586 = vmul.f32 %v403, %v1544
        %v1587 = vmul.f32 %v404, %v1544
        %v1588 = vmul.f32 %v405, %v1544
        %v1589 = vmul.f32 %v406, %v1544
        %v1590 = vmul.f32 %v407, %v1544
        %v1591 = vmul.f32 %v408, %v1544
        %v1592 = vmul.f32 %v409, %v1544
        %v1641 = vrot.slane %v1545, 2
        %v1642 = vrot.slane %v1546, 2
        %v1643 = vsel %vm1399, %v1641, %v1642
        %v1644 = vrot.slane %v1547, 2
        %v1645 = vsel %vm1399, %v1642, %v1644
        %v1646 = vrot.slane %v1548, 2
        %v1647 = vrot.slane %v1549, 2
        %v1648 = vsel %vm1399, %v1646, %v1647
        %v1649 = vrot.slane %v1550, 2
        %v1650 = vsel %vm1399, %v1647, %v1649
        %v1651 = vrot.slane %v1551, 2
        %v1652 = vrot.slane %v1552, 2
        %v1653 = vsel %vm1399, %v1651, %v1652
        %v1654 = vrot.slane %v1553, 2
        %v1655 = vsel %vm1399, %v1652, %v1654
        %v1656 = vrot.slane %v1554, 2
        %v1657 = vrot.slane %v1555, 2
        %v1658 = vsel %vm1399, %v1656, %v1657
        %v1659 = vrot.slane %v1556, 2
        %v1660 = vsel %vm1399, %v1657, %v1659
        %v1661 = vrot.slane %v1557, 2
        %v1662 = vrot.slane %v1558, 2
        %v1663 = vsel %vm1399, %v1661, %v1662
        %v1664 = vrot.slane %v1559, 2
        %v1665 = vsel %vm1399, %v1662, %v1664
        %v1666 = vrot.slane %v1560, 2
        %v1667 = vrot.slane %v1561, 2
        %v1668 = vsel %vm1399, %v1666, %v1667
        %v1669 = vrot.slane %v1562, 2
        %v1670 = vsel %vm1399, %v1667, %v1669
        %v1671 = vrot.slane %v1563, 2
        %v1672 = vrot.slane %v1564, 2
        %v1673 = vsel %vm1399, %v1671, %v1672
        %v1674 = vrot.slane %v1565, 2
        %v1675 = vsel %vm1399, %v1672, %v1674
        %v1676 = vrot.slane %v1566, 2
        %v1677 = vrot.slane %v1567, 2
        %v1678 = vsel %vm1399, %v1676, %v1677
        %v1679 = vrot.slane %v1568, 2
        %v1680 = vsel %vm1399, %v1677, %v1679
        %v1681 = vrot.slane %v1569, 2
        %v1682 = vrot.slane %v1570, 2
        %v1683 = vsel %vm1399, %v1681, %v1682
        %v1684 = vrot.slane %v1571, 2
        %v1685 = vsel %vm1399, %v1682, %v1684
        %v1686 = vrot.slane %v1572, 2
        %v1687 = vrot.slane %v1573, 2
        %v1688 = vsel %vm1399, %v1686, %v1687
        %v1689 = vrot.slane %v1574, 2
        %v1690 = vsel %vm1399, %v1687, %v1689
        %v1691 = vrot.slane %v1575, 2
        %v1692 = vrot.slane %v1576, 2
        %v1693 = vsel %vm1399, %v1691, %v1692
        %v1694 = vrot.slane %v1577, 2
        %v1695 = vsel %vm1399, %v1692, %v1694
        %v1696 = vrot.slane %v1578, 2
        %v1697 = vrot.slane %v1579, 2
        %v1698 = vsel %vm1399, %v1696, %v1697
        %v1699 = vrot.slane %v1580, 2
        %v1700 = vsel %vm1399, %v1697, %v1699
        %v1701 = vrot.slane %v1581, 2
        %v1702 = vrot.slane %v1582, 2
        %v1703 = vsel %vm1399, %v1701, %v1702
        %v1704 = vrot.slane %v1583, 2
        %v1705 = vsel %vm1399, %v1702, %v1704
        %v1706 = vrot.slane %v1584, 2
        %v1707 = vrot.slane %v1585, 2
        %v1708 = vsel %vm1399, %v1706, %v1707
        %v1709 = vrot.slane %v1586, 2
        %v1710 = vsel %vm1399, %v1707, %v1709
        %v1711 = vrot.slane %v1587, 2
        %v1712 = vrot.slane %v1588, 2
        %v1713 = vsel %vm1399, %v1711, %v1712
        %v1714 = vrot.slane %v1589, 2
        %v1715 = vsel %vm1399, %v1712, %v1714
        %v1716 = vrot.slane %v1590, 2
        %v1717 = vrot.slane %v1591, 2
        %v1718 = vsel %vm1399, %v1716, %v1717
        %v1719 = vrot.slane %v1592, 2
        %v1720 = vsel %vm1399, %v1717, %v1719
        %v1753 = vadd.f32 %v1512, %v1643
        %v1754 = vadd.f32 %v1513, %v1645
        %v1755 = vadd.f32 %v1514, %v1648
        %v1756 = vadd.f32 %v1515, %v1650
        %v1757 = vadd.f32 %v1516, %v1653
        %v1758 = vadd.f32 %v1517, %v1655
        %v1759 = vadd.f32 %v1518, %v1658
        %v1760 = vadd.f32 %v1519, %v1660
        %v1761 = vadd.f32 %v1520, %v1663
        %v1762 = vadd.f32 %v1521, %v1665
        %v1763 = vadd.f32 %v1522, %v1668
        %v1764 = vadd.f32 %v1523, %v1670
        %v1765 = vadd.f32 %v1524, %v1673
        %v1766 = vadd.f32 %v1525, %v1675
        %v1767 = vadd.f32 %v1526, %v1678
        %v1768 = vadd.f32 %v1527, %v1680
        %v1769 = vadd.f32 %v1528, %v1683
        %v1770 = vadd.f32 %v1529, %v1685
        %v1771 = vadd.f32 %v1530, %v1688
        %v1772 = vadd.f32 %v1531, %v1690
        %v1773 = vadd.f32 %v1532, %v1693
        %v1774 = vadd.f32 %v1533, %v1695
        %v1775 = vadd.f32 %v1534, %v1698
        %v1776 = vadd.f32 %v1535, %v1700
        %v1777 = vadd.f32 %v1536, %v1703
        %v1778 = vadd.f32 %v1537, %v1705
        %v1779 = vadd.f32 %v1538, %v1708
        %v1780 = vadd.f32 %v1539, %v1710
        %v1781 = vadd.f32 %v1540, %v1713
        %v1782 = vadd.f32 %v1541, %v1715
        %v1783 = vadd.f32 %v1542, %v1718
        %v1784 = vadd.f32 %v1543, %v1720
        %v1785 = vperm.slane %v414, 0
        %v1786 = vmul.f32 %v365, %v1785
        %v1787 = vmul.f32 %v366, %v1785
        %v1788 = vmul.f32 %v367, %v1785
        %v1789 = vmul.f32 %v368, %v1785
        %v1790 = vmul.f32 %v369, %v1785
        %v1791 = vmul.f32 %v370, %v1785
        %v1792 = vmul.f32 %v371, %v1785
        %v1793 = vmul.f32 %v372, %v1785
        %v1794 = vmul.f32 %v373, %v1785
        %v1795 = vmul.f32 %v374, %v1785
        %v1796 = vmul.f32 %v375, %v1785
        %v1797 = vmul.f32 %v376, %v1785
        %v1798 = vmul.f32 %v377, %v1785
        %v1799 = vmul.f32 %v378, %v1785
        %v1800 = vmul.f32 %v379, %v1785
        %v1801 = vmul.f32 %v380, %v1785
        %v1802 = vmul.f32 %v381, %v1785
        %v1803 = vmul.f32 %v382, %v1785
        %v1804 = vmul.f32 %v383, %v1785
        %v1805 = vmul.f32 %v384, %v1785
        %v1806 = vmul.f32 %v385, %v1785
        %v1807 = vmul.f32 %v386, %v1785
        %v1808 = vmul.f32 %v387, %v1785
        %v1809 = vmul.f32 %v388, %v1785
        %v1810 = vmul.f32 %v389, %v1785
        %v1811 = vmul.f32 %v390, %v1785
        %v1812 = vmul.f32 %v391, %v1785
        %v1813 = vmul.f32 %v392, %v1785
        %v1814 = vmul.f32 %v393, %v1785
        %v1815 = vmul.f32 %v394, %v1785
        %v1816 = vmul.f32 %v395, %v1785
        %v1817 = vmul.f32 %v396, %v1785
        %v1818 = vmul.f32 %v397, %v1785
        %v1819 = vmul.f32 %v398, %v1785
        %v1820 = vmul.f32 %v399, %v1785
        %v1821 = vmul.f32 %v400, %v1785
        %v1822 = vmul.f32 %v401, %v1785
        %v1823 = vmul.f32 %v402, %v1785
        %v1824 = vmul.f32 %v403, %v1785
        %v1825 = vmul.f32 %v404, %v1785
        %v1826 = vmul.f32 %v405, %v1785
        %v1827 = vmul.f32 %v406, %v1785
        %v1828 = vmul.f32 %v407, %v1785
        %v1829 = vmul.f32 %v408, %v1785
        %v1830 = vmul.f32 %v409, %v1785
        %v1831 = vmul.f32 %v410, %v1785
        %v1832 = vmul.f32 %v411, %v1785
        %v1833 = vmul.f32 %v412, %v1785
        %v1882 = vrot.slane %v1786, 2
        %v1883 = vrot.slane %v1787, 2
        %v1884 = vsel %vm1399, %v1882, %v1883
        %v1885 = vrot.slane %v1788, 2
        %v1886 = vsel %vm1399, %v1883, %v1885
        %v1887 = vrot.slane %v1789, 2
        %v1888 = vrot.slane %v1790, 2
        %v1889 = vsel %vm1399, %v1887, %v1888
        %v1890 = vrot.slane %v1791, 2
        %v1891 = vsel %vm1399, %v1888, %v1890
        %v1892 = vrot.slane %v1792, 2
        %v1893 = vrot.slane %v1793, 2
        %v1894 = vsel %vm1399, %v1892, %v1893
        %v1895 = vrot.slane %v1794, 2
        %v1896 = vsel %vm1399, %v1893, %v1895
        %v1897 = vrot.slane %v1795, 2
        %v1898 = vrot.slane %v1796, 2
        %v1899 = vsel %vm1399, %v1897, %v1898
        %v1900 = vrot.slane %v1797, 2
        %v1901 = vsel %vm1399, %v1898, %v1900
        %v1902 = vrot.slane %v1798, 2
        %v1903 = vrot.slane %v1799, 2
        %v1904 = vsel %vm1399, %v1902, %v1903
        %v1905 = vrot.slane %v1800, 2
        %v1906 = vsel %vm1399, %v1903, %v1905
        %v1907 = vrot.slane %v1801, 2
        %v1908 = vrot.slane %v1802, 2
        %v1909 = vsel %vm1399, %v1907, %v1908
        %v1910 = vrot.slane %v1803, 2
        %v1911 = vsel %vm1399, %v1908, %v1910
        %v1912 = vrot.slane %v1804, 2
        %v1913 = vrot.slane %v1805, 2
        %v1914 = vsel %vm1399, %v1912, %v1913
        %v1915 = vrot.slane %v1806, 2
        %v1916 = vsel %vm1399, %v1913, %v1915
        %v1917 = vrot.slane %v1807, 2
        %v1918 = vrot.slane %v1808, 2
        %v1919 = vsel %vm1399, %v1917, %v1918
        %v1920 = vrot.slane %v1809, 2
        %v1921 = vsel %vm1399, %v1918, %v1920
        %v1922 = vrot.slane %v1810, 2
        %v1923 = vrot.slane %v1811, 2
        %v1924 = vsel %vm1399, %v1922, %v1923
        %v1925 = vrot.slane %v1812, 2
        %v1926 = vsel %vm1399, %v1923, %v1925
        %v1927 = vrot.slane %v1813, 2
        %v1928 = vrot.slane %v1814, 2
        %v1929 = vsel %vm1399, %v1927, %v1928
        %v1930 = vrot.slane %v1815, 2
        %v1931 = vsel %vm1399, %v1928, %v1930
        %v1932 = vrot.slane %v1816, 2
        %v1933 = vrot.slane %v1817, 2
        %v1934 = vsel %vm1399, %v1932, %v1933
        %v1935 = vrot.slane %v1818, 2
        %v1936 = vsel %vm1399, %v1933, %v1935
        %v1937 = vrot.slane %v1819, 2
        %v1938 = vrot.slane %v1820, 2
        %v1939 = vsel %vm1399, %v1937, %v1938
        %v1940 = vrot.slane %v1821, 2
        %v1941 = vsel %vm1399, %v1938, %v1940
        %v1942 = vrot.slane %v1822, 2
        %v1943 = vrot.slane %v1823, 2
        %v1944 = vsel %vm1399, %v1942, %v1943
        %v1945 = vrot.slane %v1824, 2
        %v1946 = vsel %vm1399, %v1943, %v1945
        %v1947 = vrot.slane %v1825, 2
        %v1948 = vrot.slane %v1826, 2
        %v1949 = vsel %vm1399, %v1947, %v1948
        %v1950 = vrot.slane %v1827, 2
        %v1951 = vsel %vm1399, %v1948, %v1950
        %v1952 = vrot.slane %v1828, 2
        %v1953 = vrot.slane %v1829, 2
        %v1954 = vsel %vm1399, %v1952, %v1953
        %v1955 = vrot.slane %v1830, 2
        %v1956 = vsel %vm1399, %v1953, %v1955
        %v1957 = vrot.slane %v1831, 2
        %v1958 = vrot.slane %v1832, 2
        %v1959 = vsel %vm1399, %v1957, %v1958
        %v1960 = vrot.slane %v1833, 2
        %v1961 = vsel %vm1399, %v1958, %v1960
        %v1994 = vadd.f32 %v1753, %v1884
        %v1995 = vadd.f32 %v1754, %v1886
        %v1996 = vadd.f32 %v1755, %v1889
        %v1997 = vadd.f32 %v1756, %v1891
        %v1998 = vadd.f32 %v1757, %v1894
        %v1999 = vadd.f32 %v1758, %v1896
        %v2000 = vadd.f32 %v1759, %v1899
        %v2001 = vadd.f32 %v1760, %v1901
        %v2002 = vadd.f32 %v1761, %v1904
        %v2003 = vadd.f32 %v1762, %v1906
        %v2004 = vadd.f32 %v1763, %v1909
        %v2005 = vadd.f32 %v1764, %v1911
        %v2006 = vadd.f32 %v1765, %v1914
        %v2007 = vadd.f32 %v1766, %v1916
        %v2008 = vadd.f32 %v1767, %v1919
        %v2009 = vadd.f32 %v1768, %v1921
        %v2010 = vadd.f32 %v1769, %v1924
        %v2011 = vadd.f32 %v1770, %v1926
        %v2012 = vadd.f32 %v1771, %v1929
        %v2013 = vadd.f32 %v1772, %v1931
        %v2014 = vadd.f32 %v1773, %v1934
        %v2015 = vadd.f32 %v1774, %v1936
        %v2016 = vadd.f32 %v1775, %v1939
        %v2017 = vadd.f32 %v1776, %v1941
        %v2018 = vadd.f32 %v1777, %v1944
        %v2019 = vadd.f32 %v1778, %v1946
        %v2020 = vadd.f32 %v1779, %v1949
        %v2021 = vadd.f32 %v1780, %v1951
        %v2022 = vadd.f32 %v1781, %v1954
        %v2023 = vadd.f32 %v1782, %v1956
        %v2024 = vadd.f32 %v1783, %v1959
        %v2025 = vadd.f32 %v1784, %v1961
        %v2026 = vld [vmem:[%s2] sm:$0x1]
        %v2028 = vperm.slane %v2026, 0
        %v2030 = vadd.f32 %v1994, %v2028
        %v2031 = vadd.f32 %v1995, %v2028
        %v2032 = vadd.f32 %v1996, %v2028
        %v2033 = vadd.f32 %v1997, %v2028
        %v2034 = vadd.f32 %v1998, %v2028
        %v2035 = vadd.f32 %v1999, %v2028
        %v2036 = vadd.f32 %v2000, %v2028
        %v2037 = vadd.f32 %v2001, %v2028
        %v2038 = vadd.f32 %v2002, %v2028
        %v2039 = vadd.f32 %v2003, %v2028
        %v2040 = vadd.f32 %v2004, %v2028
        %v2041 = vadd.f32 %v2005, %v2028
        %v2042 = vadd.f32 %v2006, %v2028
        %v2043 = vadd.f32 %v2007, %v2028
        %v2044 = vadd.f32 %v2008, %v2028
        %v2045 = vadd.f32 %v2009, %v2028
        %v2046 = vadd.f32 %v2010, %v2028
        %v2047 = vadd.f32 %v2011, %v2028
        %v2048 = vadd.f32 %v2012, %v2028
        %v2049 = vadd.f32 %v2013, %v2028
        %v2050 = vadd.f32 %v2014, %v2028
        %v2051 = vadd.f32 %v2015, %v2028
        %v2052 = vadd.f32 %v2016, %v2028
        %v2053 = vadd.f32 %v2017, %v2028
        %v2054 = vadd.f32 %v2018, %v2028
        %v2055 = vadd.f32 %v2019, %v2028
        %v2056 = vadd.f32 %v2020, %v2028
        %v2057 = vadd.f32 %v2021, %v2028
        %v2058 = vadd.f32 %v2022, %v2028
        %v2059 = vadd.f32 %v2023, %v2028
        %v2060 = vadd.f32 %v2024, %v2028
        %v2061 = vadd.f32 %v2025, %v2028
        %v2062 = vmax.f32 %v2030, 0.0
        %v2063 = vmax.f32 %v2031, 0.0
        %v2064 = vmax.f32 %v2032, 0.0
        %v2065 = vmax.f32 %v2033, 0.0
        %v2066 = vmax.f32 %v2034, 0.0
        %v2067 = vmax.f32 %v2035, 0.0
        %v2068 = vmax.f32 %v2036, 0.0
        %v2069 = vmax.f32 %v2037, 0.0
        %v2070 = vmax.f32 %v2038, 0.0
        %v2071 = vmax.f32 %v2039, 0.0
        %v2072 = vmax.f32 %v2040, 0.0
        %v2073 = vmax.f32 %v2041, 0.0
        %v2074 = vmax.f32 %v2042, 0.0
        %v2075 = vmax.f32 %v2043, 0.0
        %v2076 = vmax.f32 %v2044, 0.0
        %v2077 = vmax.f32 %v2045, 0.0
        %v2078 = vmax.f32 %v2046, 0.0
        %v2079 = vmax.f32 %v2047, 0.0
        %v2080 = vmax.f32 %v2048, 0.0
        %v2081 = vmax.f32 %v2049, 0.0
        %v2082 = vmax.f32 %v2050, 0.0
        %v2083 = vmax.f32 %v2051, 0.0
        %v2084 = vmax.f32 %v2052, 0.0
        %v2085 = vmax.f32 %v2053, 0.0
        %v2086 = vmax.f32 %v2054, 0.0
        %v2087 = vmax.f32 %v2055, 0.0
        %v2088 = vmax.f32 %v2056, 0.0
        %v2089 = vmax.f32 %v2057, 0.0
        %v2090 = vmax.f32 %v2058, 0.0
        %v2091 = vmax.f32 %v2059, 0.0
        %v2092 = vmax.f32 %v2060, 0.0
        %v2093 = vmax.f32 %v2061, 0.0
        %v2094 = vpack.c.bf16 %v2062, %v2062
        %v2095 = vpack.c.bf16 %v2063, %v2063
        %v2096 = vpack.c.bf16 %v2064, %v2064
        %v2097 = vpack.c.bf16 %v2065, %v2065
        %v2098 = vpack.c.bf16 %v2066, %v2066
        %v2099 = vpack.c.bf16 %v2067, %v2067
        %v2100 = vpack.c.bf16 %v2068, %v2068
        %v2101 = vpack.c.bf16 %v2069, %v2069
        %v2102 = vpack.c.bf16 %v2070, %v2070
        %v2103 = vpack.c.bf16 %v2071, %v2071
        %v2104 = vpack.c.bf16 %v2072, %v2072
        %v2105 = vpack.c.bf16 %v2073, %v2073
        %v2106 = vpack.c.bf16 %v2074, %v2074
        %v2107 = vpack.c.bf16 %v2075, %v2075
        %v2108 = vpack.c.bf16 %v2076, %v2076
        %v2109 = vpack.c.bf16 %v2077, %v2077
        %v2110 = vpack.c.bf16 %v2078, %v2078
        %v2111 = vpack.c.bf16 %v2079, %v2079
        %v2112 = vpack.c.bf16 %v2080, %v2080
        %v2113 = vpack.c.bf16 %v2081, %v2081
        %v2114 = vpack.c.bf16 %v2082, %v2082
        %v2115 = vpack.c.bf16 %v2083, %v2083
        %v2116 = vpack.c.bf16 %v2084, %v2084
        %v2117 = vpack.c.bf16 %v2085, %v2085
        %v2118 = vpack.c.bf16 %v2086, %v2086
        %v2119 = vpack.c.bf16 %v2087, %v2087
        %v2120 = vpack.c.bf16 %v2088, %v2088
        %v2121 = vpack.c.bf16 %v2089, %v2089
        %v2122 = vpack.c.bf16 %v2090, %v2090
        %v2123 = vpack.c.bf16 %v2091, %v2091
        %v2124 = vpack.c.bf16 %v2092, %v2092
        %v2125 = vpack.c.bf16 %v2093, %v2093
        %vm2126 = vcmask 27648
        %2127 = vst.msk [vmem:[#allocation2] sm:$0xf] %vm2126, %v2094
        %2128 = vst.msk [vmem:[#allocation2 + $0x4] sm:$0xf] %vm2126, %v2095
        %2129 = vst.msk [vmem:[#allocation2 + $0x8] sm:$0xf] %vm2126, %v2096
        %2130 = vst.msk [vmem:[#allocation2 + $0xc] sm:$0xf] %vm2126, %v2097
        %2131 = vst.msk [vmem:[#allocation2 + $0x10] sm:$0xf] %vm2126, %v2098
        %2132 = vst.msk [vmem:[#allocation2 + $0x14] sm:$0xf] %vm2126, %v2099
        %2133 = vst.msk [vmem:[#allocation2 + $0x18] sm:$0xf] %vm2126, %v2100
        %2134 = vst.msk [vmem:[#allocation2 + $0x1c] sm:$0xf] %vm2126, %v2101
        %2135 = vst.msk [vmem:[#allocation2 + $0x20] sm:$0xf] %vm2126, %v2102
        %2136 = vst.msk [vmem:[#allocation2 + $0x24] sm:$0xf] %vm2126, %v2103
        %2137 = vst.msk [vmem:[#allocation2 + $0x28] sm:$0xf] %vm2126, %v2104
        %2138 = vst.msk [vmem:[#allocation2 + $0x2c] sm:$0xf] %vm2126, %v2105
        %2139 = vst.msk [vmem:[#allocation2 + $0x30] sm:$0xf] %vm2126, %v2106
        %2140 = vst.msk [vmem:[#allocation2 + $0x34] sm:$0xf] %vm2126, %v2107
        %2141 = vst.msk [vmem:[#allocation2 + $0x38] sm:$0xf] %vm2126, %v2108
        %2142 = vst.msk [vmem:[#allocation2 + $0x3c] sm:$0xf] %vm2126, %v2109
        %2143 = vst.msk [vmem:[#allocation2 + $0x40] sm:$0xf] %vm2126, %v2110
        %2144 = vst.msk [vmem:[#allocation2 + $0x44] sm:$0xf] %vm2126, %v2111
        %2145 = vst.msk [vmem:[#allocation2 + $0x48] sm:$0xf] %vm2126, %v2112
        %2146 = vst.msk [vmem:[#allocation2 + $0x4c] sm:$0xf] %vm2126, %v2113
        %2147 = vst.msk [vmem:[#allocation2 + $0x50] sm:$0xf] %vm2126, %v2114
        %2148 = vst.msk [vmem:[#allocation2 + $0x54] sm:$0xf] %vm2126, %v2115
        %2149 = vst.msk [vmem:[#allocation2 + $0x58] sm:$0xf] %vm2126, %v2116
        %2150 = vst.msk [vmem:[#allocation2 + $0x5c] sm:$0xf] %vm2126, %v2117
        %2151 = vst.msk [vmem:[#allocation2 + $0x60] sm:$0xf] %vm2126, %v2118
        %2152 = vst.msk [vmem:[#allocation2 + $0x64] sm:$0xf] %vm2126, %v2119
        %2153 = vst.msk [vmem:[#allocation2 + $0x68] sm:$0xf] %vm2126, %v2120
        %2154 = vst.msk [vmem:[#allocation2 + $0x6c] sm:$0xf] %vm2126, %v2121
        %2155 = vst.msk [vmem:[#allocation2 + $0x70] sm:$0xf] %vm2126, %v2122
        %2156 = vst.msk [vmem:[#allocation2 + $0x74] sm:$0xf] %vm2126, %v2123
        %2157 = vst.msk [vmem:[#allocation2 + $0x78] sm:$0xf] %vm2126, %v2124
        %2158 = vst.msk [vmem:[#allocation2 + $0x7c] sm:$0xf] %vm2126, %v2125
      $region44: #{tpu_custom_call.1} parent=39 // pred_fallthru
        _
      %v2159 = vld [vmem:[#allocation2] sm:$0xf]
      %v2160 = vld [vmem:[#allocation2 + $0x4] sm:$0xf]
      %v2161 = vld [vmem:[#allocation2 + $0x8] sm:$0xf]
      %v2162 = vld [vmem:[#allocation2 + $0xc] sm:$0xf]
      %v2163 = vld [vmem:[#allocation2 + $0x10] sm:$0xf]
      %v2164 = vld [vmem:[#allocation2 + $0x14] sm:$0xf]
      %v2165 = vld [vmem:[#allocation2 + $0x18] sm:$0xf]
      %v2166 = vld [vmem:[#allocation2 + $0x1c] sm:$0xf]
      %v2167 = vld [vmem:[#allocation2 + $0x20] sm:$0xf]
      %v2168 = vld [vmem:[#allocation2 + $0x24] sm:$0xf]
      %v2169 = vld [vmem:[#allocation2 + $0x28] sm:$0xf]
      %v2170 = vld [vmem:[#allocation2 + $0x2c] sm:$0xf]
      %v2171 = vld [vmem:[#allocation2 + $0x30] sm:$0xf]
      %v2172 = vld [vmem:[#allocation2 + $0x34] sm:$0xf]
      %v2173 = vld [vmem:[#allocation2 + $0x38] sm:$0xf]
      %v2174 = vld [vmem:[#allocation2 + $0x3c] sm:$0xf]
      %v2175 = vld [vmem:[#allocation2 + $0x40] sm:$0xf]
      %v2176 = vld [vmem:[#allocation2 + $0x44] sm:$0xf]
      %v2177 = vld [vmem:[#allocation2 + $0x48] sm:$0xf]
      %v2178 = vld [vmem:[#allocation2 + $0x4c] sm:$0xf]
      %v2179 = vld [vmem:[#allocation2 + $0x50] sm:$0xf]
      %v2180 = vld [vmem:[#allocation2 + $0x54] sm:$0xf]
      %v2181 = vld [vmem:[#allocation2 + $0x58] sm:$0xf]
      %v2182 = vld [vmem:[#allocation2 + $0x5c] sm:$0xf]
      %v2183 = vld [vmem:[#allocation2 + $0x60] sm:$0xf]
      %v2184 = vld [vmem:[#allocation2 + $0x64] sm:$0xf]
      %v2185 = vld [vmem:[#allocation2 + $0x68] sm:$0xf]
      %v2186 = vld [vmem:[#allocation2 + $0x6c] sm:$0xf]
      %v2187 = vld [vmem:[#allocation2 + $0x70] sm:$0xf]
      %v2188 = vld [vmem:[#allocation2 + $0x74] sm:$0xf]
      %v2189 = vld [vmem:[#allocation2 + $0x78] sm:$0xf]
      %v2190 = vld [vmem:[#allocation2 + $0x7c] sm:$0xf]
      %v2191 = vld [vmem:[%s278] sm:$0x3]
      %v2192 = vld [vmem:[%s281] sm:$0x1]
      %v2194 = vperm.slane %v2192, 0
      %v2228 = vunpack.c.l.b16 %v2159
      %v2229 = vunpack.c.l.b16 %v2160
      %v2230 = vunpack.c.l.b16 %v2161
      %v2231 = vunpack.c.l.b16 %v2162
      %v2232 = vunpack.c.l.b16 %v2163
      %v2233 = vunpack.c.l.b16 %v2164
      %v2234 = vunpack.c.l.b16 %v2165
      %v2235 = vunpack.c.l.b16 %v2166
      %v2236 = vunpack.c.l.b16 %v2167
      %v2237 = vunpack.c.l.b16 %v2168
      %v2238 = vunpack.c.l.b16 %v2169
      %v2239 = vunpack.c.l.b16 %v2170
      %v2240 = vunpack.c.l.b16 %v2171
      %v2241 = vunpack.c.l.b16 %v2172
      %v2242 = vunpack.c.l.b16 %v2173
      %v2243 = vunpack.c.l.b16 %v2174
      %v2244 = vunpack.c.l.b16 %v2175
      %v2245 = vunpack.c.l.b16 %v2176
      %v2246 = vunpack.c.l.b16 %v2177
      %v2247 = vunpack.c.l.b16 %v2178
      %v2248 = vunpack.c.l.b16 %v2179
      %v2249 = vunpack.c.l.b16 %v2180
      %v2250 = vunpack.c.l.b16 %v2181
      %v2251 = vunpack.c.l.b16 %v2182
      %v2252 = vunpack.c.l.b16 %v2183
      %v2253 = vunpack.c.l.b16 %v2184
      %v2254 = vunpack.c.l.b16 %v2185
      %v2255 = vunpack.c.l.b16 %v2186
      %v2256 = vunpack.c.l.b16 %v2187
      %v2257 = vunpack.c.l.b16 %v2188
      %v2258 = vunpack.c.l.b16 %v2189
      %v2259 = vunpack.c.l.b16 %v2190
      %v2260 = vpack.c.b16 %v2229, %v2228
      %v2261 = vpack.c.b16 %v2231, %v2230
      %v2262 = vpack.c.b16 %v2233, %v2232
      %v2263 = vpack.c.b16 %v2235, %v2234
      %v2264 = vpack.c.b16 %v2237, %v2236
      %v2265 = vpack.c.b16 %v2239, %v2238
      %v2266 = vpack.c.b16 %v2241, %v2240
      %v2267 = vpack.c.b16 %v2243, %v2242
      %v2268 = vpack.c.b16 %v2245, %v2244
      %v2269 = vpack.c.b16 %v2247, %v2246
      %v2270 = vpack.c.b16 %v2249, %v2248
      %v2271 = vpack.c.b16 %v2251, %v2250
      %v2272 = vpack.c.b16 %v2253, %v2252
      %v2273 = vpack.c.b16 %v2255, %v2254
      %v2274 = vpack.c.b16 %v2257, %v2256
      %v2275 = vpack.c.b16 %v2259, %v2258
      %vm2276 = vcmask 31744
      %v2278 = vsel %vm2276, %v2260, 0
      %v2281 = vsel %vm2276, %v2261, 0
      %v2284 = vsel %vm2276, %v2262, 0
      %v2287 = vsel %vm2276, %v2263, 0
      %v2290 = vsel %vm2276, %v2264, 0
      %v2293 = vsel %vm2276, %v2265, 0
      %v2296 = vsel %vm2276, %v2266, 0
      %v2299 = vsel %vm2276, %v2267, 0
      %v2302 = vsel %vm2276, %v2268, 0
      %v2305 = vsel %vm2276, %v2269, 0
      %v2308 = vsel %vm2276, %v2270, 0
      %v2311 = vsel %vm2276, %v2271, 0
      %v2314 = vsel %vm2276, %v2272, 0
      %v2317 = vsel %vm2276, %v2273, 0
      %v2320 = vsel %vm2276, %v2274, 0
      %v2323 = vsel %vm2276, %v2275, 0
      %vm2325 = vcmask 1041408
      %v2327 = vsel %vm2325, %v2191, 0
      %2329 = vmatpush.bf16.msra.mxu0 0
      %2330 = vmatpush.bf16.msra.mxu0 0
      %2331 = vmatpush.bf16.msra.mxu0 0
      %2332 = vmatpush.bf16.msra.mxu0 0
      %2333 = vmatpush.bf16.msra.mxu0 0
      %2334 = vmatpush.bf16.msra.mxu0 0
      %2335 = vmatpush.bf16.msra.mxu0 0
      %2336 = vmatpush.bf16.msra.mxu0 %v2327
      %2337 = vmatmul.bf16.gmra.mxu0 %v2278
      %v2338 = vpop.f32.mrf.mxu0
      %v2339 = vadd.f32 %v2194, %v2338
      %v2340 = vpop.f32.mrf.mxu0
      %v2341 = vadd.f32 %v2194, %v2340
      %2342 = vmatmul.bf16.gmra.mxu0 %v2281
      %v2343 = vpop.f32.mrf.mxu0
      %v2344 = vadd.f32 %v2194, %v2343
      %v2345 = vpop.f32.mrf.mxu0
      %v2346 = vadd.f32 %v2194, %v2345
      %2347 = vmatmul.bf16.gmra.mxu0 %v2284
      %v2348 = vpop.f32.mrf.mxu0
      %v2349 = vadd.f32 %v2194, %v2348
      %v2350 = vpop.f32.mrf.mxu0
      %v2351 = vadd.f32 %v2194, %v2350
      %2352 = vmatmul.bf16.gmra.mxu0 %v2287
      %v2353 = vpop.f32.mrf.mxu0
      %v2354 = vadd.f32 %v2194, %v2353
      %v2355 = vpop.f32.mrf.mxu0
      %v2356 = vadd.f32 %v2194, %v2355
      %2357 = vmatmul.bf16.gmra.mxu0 %v2290
      %v2358 = vpop.f32.mrf.mxu0
      %v2359 = vadd.f32 %v2194, %v2358
      %v2360 = vpop.f32.mrf.mxu0
      %v2361 = vadd.f32 %v2194, %v2360
      %2362 = vmatmul.bf16.gmra.mxu0 %v2293
      %v2363 = vpop.f32.mrf.mxu0
      %v2364 = vadd.f32 %v2194, %v2363
      %v2365 = vpop.f32.mrf.mxu0
      %v2366 = vadd.f32 %v2194, %v2365
      %2367 = vmatmul.bf16.gmra.mxu0 %v2296
      %v2368 = vpop.f32.mrf.mxu0
      %v2369 = vadd.f32 %v2194, %v2368
      %v2370 = vpop.f32.mrf.mxu0
      %v2371 = vadd.f32 %v2194, %v2370
      %2372 = vmatmul.bf16.gmra.mxu0 %v2299
      %v2373 = vpop.f32.mrf.mxu0
      %v2374 = vadd.f32 %v2194, %v2373
      %v2375 = vpop.f32.mrf.mxu0
      %v2376 = vadd.f32 %v2194, %v2375
      %2377 = vmatmul.bf16.gmra.mxu0 %v2302
      %v2378 = vpop.f32.mrf.mxu0
      %v2379 = vadd.f32 %v2194, %v2378
      %v2380 = vpop.f32.mrf.mxu0
      %v2381 = vadd.f32 %v2194, %v2380
      %2382 = vmatmul.bf16.gmra.mxu0 %v2305
      %v2383 = vpop.f32.mrf.mxu0
      %v2384 = vadd.f32 %v2194, %v2383
      %v2385 = vpop.f32.mrf.mxu0
      %v2386 = vadd.f32 %v2194, %v2385
      %2387 = vmatmul.bf16.gmra.mxu0 %v2308
      %v2388 = vpop.f32.mrf.mxu0
      %v2389 = vadd.f32 %v2194, %v2388
      %v2390 = vpop.f32.mrf.mxu0
      %v2391 = vadd.f32 %v2194, %v2390
      %2392 = vmatmul.bf16.gmra.mxu0 %v2311
      %v2393 = vpop.f32.mrf.mxu0
      %v2394 = vadd.f32 %v2194, %v2393
      %v2395 = vpop.f32.mrf.mxu0
      %v2396 = vadd.f32 %v2194, %v2395
      %2397 = vmatmul.bf16.gmra.mxu0 %v2314
      %v2398 = vpop.f32.mrf.mxu0
      %v2399 = vadd.f32 %v2194, %v2398
      %v2400 = vpop.f32.mrf.mxu0
      %v2401 = vadd.f32 %v2194, %v2400
      %2402 = vmatmul.bf16.gmra.mxu0 %v2317
      %v2403 = vpop.f32.mrf.mxu0
      %v2404 = vadd.f32 %v2194, %v2403
      %v2405 = vpop.f32.mrf.mxu0
      %v2406 = vadd.f32 %v2194, %v2405
      %2407 = vmatmul.bf16.gmra.mxu0 %v2320
      %v2408 = vpop.f32.mrf.mxu0
      %v2409 = vadd.f32 %v2194, %v2408
      %v2410 = vpop.f32.mrf.mxu0
      %v2411 = vadd.f32 %v2194, %v2410
      %2412 = vmatmul.bf16.gmra.mxu0 %v2323
      %v2413 = vpop.f32.mrf.mxu0
      %v2414 = vadd.f32 %v2194, %v2413
      %v2415 = vpop.f32.mrf.mxu0
      %v2416 = vadd.f32 %v2194, %v2415
      %2417 = vdwg.mxu0
      %v2418 = vmax.f32 %v2339, 0.0
      %v2419 = vmax.f32 %v2341, 0.0
      %v2420 = vmax.f32 %v2344, 0.0
      %v2421 = vmax.f32 %v2346, 0.0
      %v2422 = vmax.f32 %v2349, 0.0
      %v2423 = vmax.f32 %v2351, 0.0
      %v2424 = vmax.f32 %v2354, 0.0
      %v2425 = vmax.f32 %v2356, 0.0
      %v2426 = vmax.f32 %v2359, 0.0
      %v2427 = vmax.f32 %v2361, 0.0
      %v2428 = vmax.f32 %v2364, 0.0
      %v2429 = vmax.f32 %v2366, 0.0
      %v2430 = vmax.f32 %v2369, 0.0
      %v2431 = vmax.f32 %v2371, 0.0
      %v2432 = vmax.f32 %v2374, 0.0
      %v2433 = vmax.f32 %v2376, 0.0
      %v2434 = vmax.f32 %v2379, 0.0
      %v2435 = vmax.f32 %v2381, 0.0
      %v2436 = vmax.f32 %v2384, 0.0
      %v2437 = vmax.f32 %v2386, 0.0
      %v2438 = vmax.f32 %v2389, 0.0
      %v2439 = vmax.f32 %v2391, 0.0
      %v2440 = vmax.f32 %v2394, 0.0
      %v2441 = vmax.f32 %v2396, 0.0
      %v2442 = vmax.f32 %v2399, 0.0
      %v2443 = vmax.f32 %v2401, 0.0
      %v2444 = vmax.f32 %v2404, 0.0
      %v2445 = vmax.f32 %v2406, 0.0
      %v2446 = vmax.f32 %v2409, 0.0
      %v2447 = vmax.f32 %v2411, 0.0
      %v2448 = vmax.f32 %v2414, 0.0
      %v2449 = vmax.f32 %v2416, 0.0
      %v2450 = vpack.c.bf16 %v2418, %v2418
      %v2451 = vpack.c.bf16 %v2419, %v2419
      %v2452 = vpack.c.bf16 %v2420, %v2420
      %v2453 = vpack.c.bf16 %v2421, %v2421
      %v2454 = vpack.c.bf16 %v2422, %v2422
      %v2455 = vpack.c.bf16 %v2423, %v2423
      %v2456 = vpack.c.bf16 %v2424, %v2424
      %v2457 = vpack.c.bf16 %v2425, %v2425
      %v2458 = vpack.c.bf16 %v2426, %v2426
      %v2459 = vpack.c.bf16 %v2427, %v2427
      %v2460 = vpack.c.bf16 %v2428, %v2428
      %v2461 = vpack.c.bf16 %v2429, %v2429
      %v2462 = vpack.c.bf16 %v2430, %v2430
      %v2463 = vpack.c.bf16 %v2431, %v2431
      %v2464 = vpack.c.bf16 %v2432, %v2432
      %v2465 = vpack.c.bf16 %v2433, %v2433
      %v2466 = vpack.c.bf16 %v2434, %v2434
      %v2467 = vpack.c.bf16 %v2435, %v2435
      %v2468 = vpack.c.bf16 %v2436, %v2436
      %v2469 = vpack.c.bf16 %v2437, %v2437
      %v2470 = vpack.c.bf16 %v2438, %v2438
      %v2471 = vpack.c.bf16 %v2439, %v2439
      %v2472 = vpack.c.bf16 %v2440, %v2440
      %v2473 = vpack.c.bf16 %v2441, %v2441
      %v2474 = vpack.c.bf16 %v2442, %v2442
      %v2475 = vpack.c.bf16 %v2443, %v2443
      %v2476 = vpack.c.bf16 %v2444, %v2444
      %v2477 = vpack.c.bf16 %v2445, %v2445
      %v2478 = vpack.c.bf16 %v2446, %v2446
      %v2479 = vpack.c.bf16 %v2447, %v2447
      %v2480 = vpack.c.bf16 %v2448, %v2448
      %v2481 = vpack.c.bf16 %v2449, %v2449
      %vm2482 = vcmask 60416
      %2483 = vst.msk [vmem:[%s294] sm:$0xf] %vm2482, %v2450
      %2484 = vst.msk [vmem:[%s294 + $0x4] sm:$0xf] %vm2482, %v2451
      %2485 = vst.msk [vmem:[%s294 + $0x8] sm:$0xf] %vm2482, %v2452
      %2486 = vst.msk [vmem:[%s294 + $0xc] sm:$0xf] %vm2482, %v2453
      %2487 = vst.msk [vmem:[%s294 + $0x10] sm:$0xf] %vm2482, %v2454
      %2488 = vst.msk [vmem:[%s294 + $0x14] sm:$0xf] %vm2482, %v2455
      %2489 = vst.msk [vmem:[%s294 + $0x18] sm:$0xf] %vm2482, %v2456
      %2490 = vst.msk [vmem:[%s294 + $0x1c] sm:$0xf] %vm2482, %v2457
      %2491 = vst.msk [vmem:[%s294 + $0x20] sm:$0xf] %vm2482, %v2458
      %2492 = vst.msk [vmem:[%s294 + $0x24] sm:$0xf] %vm2482, %v2459
      %2493 = vst.msk [vmem:[%s294 + $0x28] sm:$0xf] %vm2482, %v2460
      %2494 = vst.msk [vmem:[%s294 + $0x2c] sm:$0xf] %vm2482, %v2461
      %2495 = vst.msk [vmem:[%s294 + $0x30] sm:$0xf] %vm2482, %v2462
      %2496 = vst.msk [vmem:[%s294 + $0x34] sm:$0xf] %vm2482, %v2463
      %2497 = vst.msk [vmem:[%s294 + $0x38] sm:$0xf] %vm2482, %v2464
      %2498 = vst.msk [vmem:[%s294 + $0x3c] sm:$0xf] %vm2482, %v2465
      %2499 = vst.msk [vmem:[%s294 + $0x40] sm:$0xf] %vm2482, %v2466
      %2500 = vst.msk [vmem:[%s294 + $0x44] sm:$0xf] %vm2482, %v2467
      %2501 = vst.msk [vmem:[%s294 + $0x48] sm:$0xf] %vm2482, %v2468
      %2502 = vst.msk [vmem:[%s294 + $0x4c] sm:$0xf] %vm2482, %v2469
      %2503 = vst.msk [vmem:[%s294 + $0x50] sm:$0xf] %vm2482, %v2470
      %2504 = vst.msk [vmem:[%s294 + $0x54] sm:$0xf] %vm2482, %v2471
      %2505 = vst.msk [vmem:[%s294 + $0x58] sm:$0xf] %vm2482, %v2472
      %2506 = vst.msk [vmem:[%s294 + $0x5c] sm:$0xf] %vm2482, %v2473
      %2507 = vst.msk [vmem:[%s294 + $0x60] sm:$0xf] %vm2482, %v2474
      %2508 = vst.msk [vmem:[%s294 + $0x64] sm:$0xf] %vm2482, %v2475
      %2509 = vst.msk [vmem:[%s294 + $0x68] sm:$0xf] %vm2482, %v2476
      %2510 = vst.msk [vmem:[%s294 + $0x6c] sm:$0xf] %vm2482, %v2477
      %2511 = vst.msk [vmem:[%s294 + $0x70] sm:$0xf] %vm2482, %v2478
      %2512 = vst.msk [vmem:[%s294 + $0x74] sm:$0xf] %vm2482, %v2479
      %2513 = vst.msk [vmem:[%s294 + $0x78] sm:$0xf] %vm2482, %v2480
      %2514 = vst.msk [vmem:[%s294 + $0x7c] sm:$0xf] %vm2482, %v2481
      %s2515 = smul.u32 16, %s22
      %p2516 = scmp.lt.s32.totalorder %s21, 1
      %s2517 = scalar_select %p2516, %s21, 1
      %p2518 = scmp.lt.s32.totalorder %s2515, 15
      %s2519 = scalar_select %p2518, %s2515, 15
      %p2520 = scmp.lt.s32.totalorder %s23, 0
      %s2521 = scalar_select %p2520, %s23, 0
      %s2522 = smul.addr %s2519, 2
      %s2523 = sadd.s32 %s2521, %s2522
      %s2524 = smul.addr %s2517, 32
      %s2525 = sadd.s32 %s2523, %s2524
      %s2526 = smul.addr %s2525, 4
      %s2527 = scalar_lea.vmem %s5, %s2526
      // Predicated region
      $region45: #{tpu_custom_call.1} parent=39 // pred_check
        %p2528 = pneg %p177
      $region46: #{tpu_custom_call.1} parent=39 // pred_check_branch
        %2530 = sbr.rel (%p2528) target = $region48
      $region47: #{tpu_custom_call.1} parent=39 // pred_region
        %s2531 = smul.u32 16, %s22
      $region48: #{tpu_custom_call.1} parent=39 // pred_fallthru
        _
    $region40: #{tpu_custom_call.1} parent=5 // pred_fallthru
      _
    %p2532 = scmp.le.s32.totalorder 2, %s11
    // Predicated region
    $region49: #{tpu_custom_call.1} parent=5 // pred_check
      %p2533 = pneg %p2532
    $region50: #{tpu_custom_call.1} parent=5 // pred_check_branch
      %2535 = sbr.rel (%p2533) target = $region52
    $region51: #{tpu_custom_call.1} parent=5 // pred_region
      %s2536 = ssub.s32 %s11, 2
      // Predicated region
      $region53: #{tpu_custom_call.1} parent=51 // pred_check
        %p2537 = pneg %p183
      $region54: #{tpu_custom_call.1} parent=51 // pred_check_branch
        %2539 = sbr.rel (%p2537) target = $region56
      $region55: #{tpu_custom_call.1} parent=51 // pred_region
        %s2540 = smul.u32 16, %s25
        %p2541 = scmp.lt.s32.totalorder %s24, 1
        %s2542 = scalar_select %p2541, %s24, 1
        %p2543 = scmp.lt.s32.totalorder %s2540, 15
        %s2544 = scalar_select %p2543, %s2540, 15
        %p2545 = scmp.lt.s32.totalorder %s26, 0
        %s2546 = scalar_select %p2545, %s26, 0
        %s2547 = smul.addr %s2544, 2
        %s2548 = sadd.s32 %s2546, %s2547
        %s2549 = smul.addr %s2542, 32
        %s2550 = sadd.s32 %s2548, %s2549
        %s2551 = smul.addr %s2550, 4
        %s2552 = scalar_lea.vmem %s5, %s2551
      $region56: #{tpu_custom_call.1} parent=51 // pred_fallthru
        _
    $region52: #{tpu_custom_call.1} parent=5 // pred_fallthru
      _
  $region6: #{tpu_custom_call.1} parent=0 // loop_footer
    %s15 = sadd.s32 1, %s11
  $region7: #{tpu_custom_call.1} parent=0 // loop_footer_branch
    %10 = sbr.rel target = $region3
  $region8: #{tpu_custom_call.1} parent=0 // loop_exit
    _

</llo_original>
